<compile_context>
chip_gen: v5e
topology: v5e:2x2
jax: 0.10.0
libtpu: 0.0.40
codegen_flags: <defaults>
</compile_context>

<pallas_src>
import jax
import jax.numpy as jnp
from jax import lax
from jax.experimental import pallas as pl
from jax.experimental.pallas import tpu as pltpu

# Keep the XLA-side glue / reference matmuls at full f32 so the tolerance check
# against the Pallas kernels is meaningful.
jax.config.update("jax_default_matmul_precision", "highest")

# Whole-array-in-VMEM block spec (all operands here are tiny; no tiling needed).
_VMEM = pl.BlockSpec(memory_space=pltpu.MemorySpace.VMEM)


# ----------------------------- LSTM kernel ----------------------------------
def lstm_kernel(gx_ref, whh_t_ref, out_ref):
    """gx_ref:    (S, B, 4H) precomputed x @ W_ih^T + (b_ih + b_hh), time-major.
       whh_t_ref: (H, 4H)    pre-transposed recurrent weights.
       out_ref:   (S, B, H)  per-step hidden states."""
    S, B, G = gx_ref.shape
    H = G // 4
    w_hh_t = whh_t_ref[...]  # resident in VMEM / vregs for the whole sequence

    def step(t, carry):
        h, c = carry
        # Only the recurrent projection is on the serial path; the input
        # projection was hoisted out of the loop (folded into the embedding).
        gates = gx_ref[t] + jnp.dot(h, w_hh_t, preferred_element_type=jnp.float32)
        # PyTorch gate order: i, f, g, o.  (For production H = k*128 these
        # slices land exactly on 128-lane boundaries.)
        i_g = jax.nn.sigmoid(gates[:, 0:H])
        f_g = jax.nn.sigmoid(gates[:, H:2 * H])
        g_g = jnp.tanh(gates[:, 2 * H:3 * H])
        o_g = jax.nn.sigmoid(gates[:, 3 * H:4 * H])
        c_new = f_g * c + i_g * g_g
        h_new = o_g * jnp.tanh(c_new)
        out_ref[t] = h_new
        return h_new, c_new

    h0 = jnp.zeros((B, H), jnp.float32)
    c0 = jnp.zeros((B, H), jnp.float32)
    lax.fori_loop(0, S, step, (h0, c0), unroll=True)


def run_lstm(gates_x, w_hh_t):
    """gates_x: (S, B, 4H) f32; w_hh_t: (H, 4H) f32 -> (S, B, H) f32."""
    S, B, G = gates_x.shape
    H = w_hh_t.shape[0]
    return pl.pallas_call(
        lstm_kernel,
        out_shape=jax.ShapeDtypeStruct((S, B, H), jnp.float32),
        in_specs=[_VMEM, _VMEM],
        out_specs=_VMEM,
    )(gates_x, w_hh_t)


# --------------------------- Attention kernel --------------------------------
def attn_kernel(o_ref, wst_ref, bs_ref, us_ref, v_ref):
    """o_ref: (B, S, H) LSTM output (after the torch-style .view);
       wst_ref: (H, H) = W_s^T (pre-transposed); bs_ref: (1, H); us_ref: (B, H);
       v_ref: (B, H) context vectors."""
    o = o_ref[...]                                             # (B, S, H)
    B, S, H = o.shape
    # One batched MXU projection for all (B*S) rows (weight broadcast hoisted,
    # executed once per kernel invocation).
    w_b = jnp.broadcast_to(wst_ref[...], (B, H, H))
    u = jnp.tanh(
        jnp.einsum("bsh,bhk->bsk", o, w_b, preferred_element_type=jnp.float32)
        + bs_ref[...]
    )                                                          # (B, S, H)
    # e_t = bmm(u_i, u_s): elementwise mul + lane reduction (avoids an N=1 matmul).
    e = jnp.sum(u * us_ref[...][:, None, :], axis=-1, keepdims=True)  # (B, S, 1)
    e_max = jnp.max(e, axis=1, keepdims=True)
    p = jnp.exp(e - e_max)
    alpha = p / jnp.sum(p, axis=1, keepdims=True)              # softmax over seq
    # v = bmm(out^T, alpha): weighted sum over seq, one lane-dense (B, H) store.
    v_ref[...] = jnp.sum(o * alpha, axis=1)


def run_attention(out_bsh, w_s, b_s, u_s):
    """out_bsh: (B, S, H); w_s: (H, H); b_s: (H,); u_s: (B, H, 1) -> (B, H)."""
    B, S, H = out_bsh.shape
    return pl.pallas_call(
        attn_kernel,
        out_shape=jax.ShapeDtypeStruct((B, H), jnp.float32),
        in_specs=[_VMEM, _VMEM, _VMEM, _VMEM],
        out_specs=_VMEM,
    )(out_bsh, w_s.T, b_s.reshape(1, -1), u_s[:, :, 0])


# ------------------------------ Forward glue ---------------------------------
def attention_lstm_forward(source, params):
    # source: (B, S) int32 token ids
    B, S = source.shape
    H = params["w_hh"].shape[1]

    # Fold the (linear) embedding lookup through W_ih once: (V, 4H) table with
    # both LSTM biases fused.  Per-token input gates are then just a gather.
    gate_table = (
        jnp.dot(params["embedding"], params["w_ih"].T,
                preferred_element_type=jnp.float32)
        + params["b_ih"] + params["b_hh"]
    )                                                  # (V, 4H)
    gates_x = jnp.take(gate_table, source, axis=0)     # (B, S, 4H) gather (glue)
    gates_x = jnp.transpose(gates_x, (1, 0, 2))        # (S, B, 4H) time-major

    lstm_out = run_lstm(gates_x, params["w_hh"].T)     # (S, B, H)

    # Mirror torch `output.view(batch, -1, hidden)`: a raw reshape, NOT a transpose.
    output = lstm_out.reshape(B, -1, H)                # (B, S, H)

    return run_attention(output, params["w_s"], params["b_s"], params["u_s"])


# ------------------------------ Reference ------------------------------------
def _reference(source, params):
    x = jnp.take(params["embedding"], source, axis=0)
    x2 = jnp.transpose(x, (1, 0, 2))
    H = params["w_hh"].shape[1]
    B = source.shape[0]

    def step(carry, x_t):
        h, c = carry
        gates = (x_t @ params["w_ih"].T + params["b_ih"]
                 + h @ params["w_hh"].T + params["b_hh"])
        i = jax.nn.sigmoid(gates[:, 0:H])
        f = jax.nn.sigmoid(gates[:, H:2 * H])
        g = jnp.tanh(gates[:, 2 * H:3 * H])
        o = jax.nn.sigmoid(gates[:, 3 * H:4 * H])
        c = f * c + i * g
        h = o * jnp.tanh(c)
        return (h, c), h

    h0 = jnp.zeros((B, H), jnp.float32)
    c0 = jnp.zeros((B, H), jnp.float32)
    _, outs = lax.scan(step, (h0, c0), x2)                  # (S, B, H)
    output = outs.reshape(B, -1, H)
    u_i = jnp.tanh(output @ params["w_s"].T + params["b_s"])
    e_t = jnp.einsum("bsh,bho->bs", u_i, params["u_s"])
    alpha = jax.nn.softmax(e_t, axis=1)
    v = jnp.einsum("bsh,bs->bh", output, alpha)
    return v


# --------------------------------- Main ---------------------------------------
if __name__ == "__main__":
    B, S, V, E, H = 2, 8, 20, 16, 32

    key = jax.random.PRNGKey(0)
    keys = jax.random.split(key, 8)
    params = {
        "embedding": jax.random.normal(keys[0], (V, E), jnp.float32) * 0.1,
        "w_ih": jax.random.normal(keys[1], (4 * H, E), jnp.float32) * 0.1,
        "w_hh": jax.random.normal(keys[2], (4 * H, H), jnp.float32) * 0.1,
        "b_ih": jax.random.normal(keys[3], (4 * H,), jnp.float32) * 0.1,
        "b_hh": jax.random.normal(keys[4], (4 * H,), jnp.float32) * 0.1,
        "w_s": jax.random.normal(keys[5], (H, H), jnp.float32) * 0.1,
        "b_s": jax.random.normal(keys[6], (H,), jnp.float32) * 0.1,
        "u_s": jnp.ones((B, H, 1), jnp.float32),  # matches nn.Parameter(torch.ones(...))
    }
    source = jax.random.randint(keys[7], (B, S), 0, V, dtype=jnp.int32)

    fwd = jax.jit(attention_lstm_forward)
    v = fwd(source, params)
    v = jax.block_until_ready(v)
    assert v.shape == (B, H)

    v_ref = _reference(source, params)
    assert jnp.allclose(v, v_ref, atol=1e-4, rtol=1e-4), "mismatch vs reference"

    print("KERNEL_OK")
</pallas_src>

<mosaic_0001>
module attributes {stable_mosaic.version = 11 : i64} {
  func.func @lstm_kernel(%arg0: memref<8x2x128xf32, #tpu.memory_space<vmem>>, %arg1: memref<32x128xf32, #tpu.memory_space<vmem>>, %arg2: memref<8x2x32xf32, #tpu.memory_space<vmem>>) attributes {dimension_semantics = [], scalar_prefetch = 0 : i64, scratch_operands = 0 : i64, tpu.core_type = #tpu.core_type<tc>} {
    %c0 = arith.constant 0 : index
    %c0_0 = arith.constant 0 : index
    %0 = vector.load %arg1[%c0, %c0_0] : memref<32x128xf32, #tpu.memory_space<vmem>>, vector<32x128xf32>
    %cst = arith.constant 0.000000e+00 : f32
    %1 = vector.broadcast %cst : f32 to vector<2x32xf32>
    %cst_1 = arith.constant 0.000000e+00 : f32
    %2 = vector.broadcast %cst_1 : f32 to vector<2x32xf32>
    %c0_i32 = arith.constant 0 : i32
    %3 = arith.index_cast %c0_i32 : i32 to index
    %c0_2 = arith.constant 0 : index
    %c0_3 = arith.constant 0 : index
    %4 = vector.load %arg0[%3, %c0_2, %c0_3] : memref<8x2x128xf32, #tpu.memory_space<vmem>>, vector<1x2x128xf32>
    %5 = vector.shape_cast %4 : vector<1x2x128xf32> to vector<2x128xf32>
    %cst_4 = arith.constant dense<0.000000e+00> : vector<2x128xf32>
    %6 = tpu.matmul %1, %0, %cst_4 {dimension_numbers = #tpu.dot_dimension_numbers<[1], [0], [0], [1], [0, 0, 1, 1], [], []>, precision = #tpu.contract_precision<fp32>} : vector<2x32xf32>, vector<32x128xf32>, vector<2x128xf32> -> vector<2x128xf32>
    %7 = arith.addf %5, %6 : vector<2x128xf32>
    %8 = vector.extract_strided_slice %7 {offsets = [0, 0], sizes = [2, 32], strides = [1, 1]} : vector<2x128xf32> to vector<2x32xf32>
    %9 = arith.negf %8 : vector<2x32xf32>
    %10 = math.exp %9 : vector<2x32xf32>
    %cst_5 = arith.constant 1.000000e+00 : f32
    %11 = vector.broadcast %cst_5 : f32 to vector<2x32xf32>
    %12 = arith.addf %11, %10 : vector<2x32xf32>
    %13 = arith.divf %11, %12 : vector<2x32xf32>
    %14 = vector.extract_strided_slice %7 {offsets = [0, 32], sizes = [2, 32], strides = [1, 1]} : vector<2x128xf32> to vector<2x32xf32>
    %15 = arith.negf %14 : vector<2x32xf32>
    %16 = math.exp %15 : vector<2x32xf32>
    %cst_6 = arith.constant 1.000000e+00 : f32
    %17 = vector.broadcast %cst_6 : f32 to vector<2x32xf32>
    %18 = arith.addf %17, %16 : vector<2x32xf32>
    %19 = arith.divf %17, %18 : vector<2x32xf32>
    %20 = vector.extract_strided_slice %7 {offsets = [0, 64], sizes = [2, 32], strides = [1, 1]} : vector<2x128xf32> to vector<2x32xf32>
    %21 = math.tanh %20 : vector<2x32xf32>
    %22 = vector.extract_strided_slice %7 {offsets = [0, 96], sizes = [2, 32], strides = [1, 1]} : vector<2x128xf32> to vector<2x32xf32>
    %23 = arith.negf %22 : vector<2x32xf32>
    %24 = math.exp %23 : vector<2x32xf32>
    %cst_7 = arith.constant 1.000000e+00 : f32
    %25 = vector.broadcast %cst_7 : f32 to vector<2x32xf32>
    %26 = arith.addf %25, %24 : vector<2x32xf32>
    %27 = arith.divf %25, %26 : vector<2x32xf32>
    %28 = arith.mulf %19, %2 : vector<2x32xf32>
    %29 = arith.mulf %13, %21 : vector<2x32xf32>
    %30 = arith.addf %28, %29 : vector<2x32xf32>
    %31 = math.tanh %30 : vector<2x32xf32>
    %32 = arith.mulf %27, %31 : vector<2x32xf32>
    %33 = arith.index_cast %c0_i32 : i32 to index
    %c0_8 = arith.constant 0 : index
    %c0_9 = arith.constant 0 : index
    %34 = vector.load %arg2[%33, %c0_8, %c0_9] : memref<8x2x32xf32, #tpu.memory_space<vmem>>, vector<1x2x32xf32>
    %35 = vector.shape_cast %34 : vector<1x2x32xf32> to vector<2x32xf32>
    %36 = vector.shape_cast %32 : vector<2x32xf32> to vector<1x2x32xf32>
    tpu.vector_store %arg2[%33, %c0_8, %c0_9], %36 {strides = array<i32>} : memref<8x2x32xf32, #tpu.memory_space<vmem>>, vector<1x2x32xf32>,
    %c1_i32 = arith.constant 1 : i32
    %37 = arith.index_cast %c1_i32 : i32 to index
    %c0_10 = arith.constant 0 : index
    %c0_11 = arith.constant 0 : index
    %38 = vector.load %arg0[%37, %c0_10, %c0_11] : memref<8x2x128xf32, #tpu.memory_space<vmem>>, vector<1x2x128xf32>
    %39 = vector.shape_cast %38 : vector<1x2x128xf32> to vector<2x128xf32>
    %cst_12 = arith.constant dense<0.000000e+00> : vector<2x128xf32>
    %40 = tpu.matmul %32, %0, %cst_12 {dimension_numbers = #tpu.dot_dimension_numbers<[1], [0], [0], [1], [0, 0, 1, 1], [], []>, precision = #tpu.contract_precision<fp32>} : vector<2x32xf32>, vector<32x128xf32>, vector<2x128xf32> -> vector<2x128xf32>
    %41 = arith.addf %39, %40 : vector<2x128xf32>
    %42 = vector.extract_strided_slice %41 {offsets = [0, 0], sizes = [2, 32], strides = [1, 1]} : vector<2x128xf32> to vector<2x32xf32>
    %43 = arith.negf %42 : vector<2x32xf32>
    %44 = math.exp %43 : vector<2x32xf32>
    %cst_13 = arith.constant 1.000000e+00 : f32
    %45 = vector.broadcast %cst_13 : f32 to vector<2x32xf32>
    %46 = arith.addf %45, %44 : vector<2x32xf32>
    %47 = arith.divf %45, %46 : vector<2x32xf32>
    %48 = vector.extract_strided_slice %41 {offsets = [0, 32], sizes = [2, 32], strides = [1, 1]} : vector<2x128xf32> to vector<2x32xf32>
    %49 = arith.negf %48 : vector<2x32xf32>
    %50 = math.exp %49 : vector<2x32xf32>
    %cst_14 = arith.constant 1.000000e+00 : f32
    %51 = vector.broadcast %cst_14 : f32 to vector<2x32xf32>
    %52 = arith.addf %51, %50 : vector<2x32xf32>
    %53 = arith.divf %51, %52 : vector<2x32xf32>
    %54 = vector.extract_strided_slice %41 {offsets = [0, 64], sizes = [2, 32], strides = [1, 1]} : vector<2x128xf32> to vector<2x32xf32>
    %55 = math.tanh %54 : vector<2x32xf32>
    %56 = vector.extract_strided_slice %41 {offsets = [0, 96], sizes = [2, 32], strides = [1, 1]} : vector<2x128xf32> to vector<2x32xf32>
    %57 = arith.negf %56 : vector<2x32xf32>
    %58 = math.exp %57 : vector<2x32xf32>
    %cst_15 = arith.constant 1.000000e+00 : f32
    %59 = vector.broadcast %cst_15 : f32 to vector<2x32xf32>
    %60 = arith.addf %59, %58 : vector<2x32xf32>
    %61 = arith.divf %59, %60 : vector<2x32xf32>
    %62 = arith.mulf %53, %30 : vector<2x32xf32>
    %63 = arith.mulf %47, %55 : vector<2x32xf32>
    %64 = arith.addf %62, %63 : vector<2x32xf32>
    %65 = math.tanh %64 : vector<2x32xf32>
    %66 = arith.mulf %61, %65 : vector<2x32xf32>
    %67 = arith.index_cast %c1_i32 : i32 to index
    %c0_16 = arith.constant 0 : index
    %c0_17 = arith.constant 0 : index
    %68 = vector.load %arg2[%67, %c0_16, %c0_17] : memref<8x2x32xf32, #tpu.memory_space<vmem>>, vector<1x2x32xf32>
    %69 = vector.shape_cast %68 : vector<1x2x32xf32> to vector<2x32xf32>
    %70 = vector.shape_cast %66 : vector<2x32xf32> to vector<1x2x32xf32>
    tpu.vector_store %arg2[%67, %c0_16, %c0_17], %70 {strides = array<i32>} : memref<8x2x32xf32, #tpu.memory_space<vmem>>, vector<1x2x32xf32>,
    %c2_i32 = arith.constant 2 : i32
    %71 = arith.index_cast %c2_i32 : i32 to index
    %c0_18 = arith.constant 0 : index
    %c0_19 = arith.constant 0 : index
    %72 = vector.load %arg0[%71, %c0_18, %c0_19] : memref<8x2x128xf32, #tpu.memory_space<vmem>>, vector<1x2x128xf32>
    %73 = vector.shape_cast %72 : vector<1x2x128xf32> to vector<2x128xf32>
    %cst_20 = arith.constant dense<0.000000e+00> : vector<2x128xf32>
    %74 = tpu.matmul %66, %0, %cst_20 {dimension_numbers = #tpu.dot_dimension_numbers<[1], [0], [0], [1], [0, 0, 1, 1], [], []>, precision = #tpu.contract_precision<fp32>} : vector<2x32xf32>, vector<32x128xf32>, vector<2x128xf32> -> vector<2x128xf32>
    %75 = arith.addf %73, %74 : vector<2x128xf32>
    %76 = vector.extract_strided_slice %75 {offsets = [0, 0], sizes = [2, 32], strides = [1, 1]} : vector<2x128xf32> to vector<2x32xf32>
    %77 = arith.negf %76 : vector<2x32xf32>
    %78 = math.exp %77 : vector<2x32xf32>
    %cst_21 = arith.constant 1.000000e+00 : f32
    %79 = vector.broadcast %cst_21 : f32 to vector<2x32xf32>
    %80 = arith.addf %79, %78 : vector<2x32xf32>
    %81 = arith.divf %79, %80 : vector<2x32xf32>
    %82 = vector.extract_strided_slice %75 {offsets = [0, 32], sizes = [2, 32], strides = [1, 1]} : vector<2x128xf32> to vector<2x32xf32>
    %83 = arith.negf %82 : vector<2x32xf32>
    %84 = math.exp %83 : vector<2x32xf32>
    %cst_22 = arith.constant 1.000000e+00 : f32
    %85 = vector.broadcast %cst_22 : f32 to vector<2x32xf32>
    %86 = arith.addf %85, %84 : vector<2x32xf32>
    %87 = arith.divf %85, %86 : vector<2x32xf32>
    %88 = vector.extract_strided_slice %75 {offsets = [0, 64], sizes = [2, 32], strides = [1, 1]} : vector<2x128xf32> to vector<2x32xf32>
    %89 = math.tanh %88 : vector<2x32xf32>
    %90 = vector.extract_strided_slice %75 {offsets = [0, 96], sizes = [2, 32], strides = [1, 1]} : vector<2x128xf32> to vector<2x32xf32>
    %91 = arith.negf %90 : vector<2x32xf32>
    %92 = math.exp %91 : vector<2x32xf32>
    %cst_23 = arith.constant 1.000000e+00 : f32
    %93 = vector.broadcast %cst_23 : f32 to vector<2x32xf32>
    %94 = arith.addf %93, %92 : vector<2x32xf32>
    %95 = arith.divf %93, %94 : vector<2x32xf32>
    %96 = arith.mulf %87, %64 : vector<2x32xf32>
    %97 = arith.mulf %81, %89 : vector<2x32xf32>
    %98 = arith.addf %96, %97 : vector<2x32xf32>
    %99 = math.tanh %98 : vector<2x32xf32>
    %100 = arith.mulf %95, %99 : vector<2x32xf32>
    %101 = arith.index_cast %c2_i32 : i32 to index
    %c0_24 = arith.constant 0 : index
    %c0_25 = arith.constant 0 : index
    %102 = vector.load %arg2[%101, %c0_24, %c0_25] : memref<8x2x32xf32, #tpu.memory_space<vmem>>, vector<1x2x32xf32>
    %103 = vector.shape_cast %102 : vector<1x2x32xf32> to vector<2x32xf32>
    %104 = vector.shape_cast %100 : vector<2x32xf32> to vector<1x2x32xf32>
    tpu.vector_store %arg2[%101, %c0_24, %c0_25], %104 {strides = array<i32>} : memref<8x2x32xf32, #tpu.memory_space<vmem>>, vector<1x2x32xf32>,
    %c3_i32 = arith.constant 3 : i32
    %105 = arith.index_cast %c3_i32 : i32 to index
    %c0_26 = arith.constant 0 : index
    %c0_27 = arith.constant 0 : index
    %106 = vector.load %arg0[%105, %c0_26, %c0_27] : memref<8x2x128xf32, #tpu.memory_space<vmem>>, vector<1x2x128xf32>
    %107 = vector.shape_cast %106 : vector<1x2x128xf32> to vector<2x128xf32>
    %cst_28 = arith.constant dense<0.000000e+00> : vector<2x128xf32>
    %108 = tpu.matmul %100, %0, %cst_28 {dimension_numbers = #tpu.dot_dimension_numbers<[1], [0], [0], [1], [0, 0, 1, 1], [], []>, precision = #tpu.contract_precision<fp32>} : vector<2x32xf32>, vector<32x128xf32>, vector<2x128xf32> -> vector<2x128xf32>
    %109 = arith.addf %107, %108 : vector<2x128xf32>
    %110 = vector.extract_strided_slice %109 {offsets = [0, 0], sizes = [2, 32], strides = [1, 1]} : vector<2x128xf32> to vector<2x32xf32>
    %111 = arith.negf %110 : vector<2x32xf32>
    %112 = math.exp %111 : vector<2x32xf32>
    %cst_29 = arith.constant 1.000000e+00 : f32
    %113 = vector.broadcast %cst_29 : f32 to vector<2x32xf32>
    %114 = arith.addf %113, %112 : vector<2x32xf32>
    %115 = arith.divf %113, %114 : vector<2x32xf32>
    %116 = vector.extract_strided_slice %109 {offsets = [0, 32], sizes = [2, 32], strides = [1, 1]} : vector<2x128xf32> to vector<2x32xf32>
    %117 = arith.negf %116 : vector<2x32xf32>
    %118 = math.exp %117 : vector<2x32xf32>
    %cst_30 = arith.constant 1.000000e+00 : f32
    %119 = vector.broadcast %cst_30 : f32 to vector<2x32xf32>
    %120 = arith.addf %119, %118 : vector<2x32xf32>
    %121 = arith.divf %119, %120 : vector<2x32xf32>
    %122 = vector.extract_strided_slice %109 {offsets = [0, 64], sizes = [2, 32], strides = [1, 1]} : vector<2x128xf32> to vector<2x32xf32>
    %123 = math.tanh %122 : vector<2x32xf32>
    %124 = vector.extract_strided_slice %109 {offsets = [0, 96], sizes = [2, 32], strides = [1, 1]} : vector<2x128xf32> to vector<2x32xf32>
    %125 = arith.negf %124 : vector<2x32xf32>
    %126 = math.exp %125 : vector<2x32xf32>
    %cst_31 = arith.constant 1.000000e+00 : f32
    %127 = vector.broadcast %cst_31 : f32 to vector<2x32xf32>
    %128 = arith.addf %127, %126 : vector<2x32xf32>
    %129 = arith.divf %127, %128 : vector<2x32xf32>
    %130 = arith.mulf %121, %98 : vector<2x32xf32>
    %131 = arith.mulf %115, %123 : vector<2x32xf32>
    %132 = arith.addf %130, %131 : vector<2x32xf32>
    %133 = math.tanh %132 : vector<2x32xf32>
    %134 = arith.mulf %129, %133 : vector<2x32xf32>
    %135 = arith.index_cast %c3_i32 : i32 to index
    %c0_32 = arith.constant 0 : index
    %c0_33 = arith.constant 0 : index
    %136 = vector.load %arg2[%135, %c0_32, %c0_33] : memref<8x2x32xf32, #tpu.memory_space<vmem>>, vector<1x2x32xf32>
    %137 = vector.shape_cast %136 : vector<1x2x32xf32> to vector<2x32xf32>
    %138 = vector.shape_cast %134 : vector<2x32xf32> to vector<1x2x32xf32>
    tpu.vector_store %arg2[%135, %c0_32, %c0_33], %138 {strides = array<i32>} : memref<8x2x32xf32, #tpu.memory_space<vmem>>, vector<1x2x32xf32>,
    %c4_i32 = arith.constant 4 : i32
    %139 = arith.index_cast %c4_i32 : i32 to index
    %c0_34 = arith.constant 0 : index
    %c0_35 = arith.constant 0 : index
    %140 = vector.load %arg0[%139, %c0_34, %c0_35] : memref<8x2x128xf32, #tpu.memory_space<vmem>>, vector<1x2x128xf32>
    %141 = vector.shape_cast %140 : vector<1x2x128xf32> to vector<2x128xf32>
    %cst_36 = arith.constant dense<0.000000e+00> : vector<2x128xf32>
    %142 = tpu.matmul %134, %0, %cst_36 {dimension_numbers = #tpu.dot_dimension_numbers<[1], [0], [0], [1], [0, 0, 1, 1], [], []>, precision = #tpu.contract_precision<fp32>} : vector<2x32xf32>, vector<32x128xf32>, vector<2x128xf32> -> vector<2x128xf32>
    %143 = arith.addf %141, %142 : vector<2x128xf32>
    %144 = vector.extract_strided_slice %143 {offsets = [0, 0], sizes = [2, 32], strides = [1, 1]} : vector<2x128xf32> to vector<2x32xf32>
    %145 = arith.negf %144 : vector<2x32xf32>
    %146 = math.exp %145 : vector<2x32xf32>
    %cst_37 = arith.constant 1.000000e+00 : f32
    %147 = vector.broadcast %cst_37 : f32 to vector<2x32xf32>
    %148 = arith.addf %147, %146 : vector<2x32xf32>
    %149 = arith.divf %147, %148 : vector<2x32xf32>
    %150 = vector.extract_strided_slice %143 {offsets = [0, 32], sizes = [2, 32], strides = [1, 1]} : vector<2x128xf32> to vector<2x32xf32>
    %151 = arith.negf %150 : vector<2x32xf32>
    %152 = math.exp %151 : vector<2x32xf32>
    %cst_38 = arith.constant 1.000000e+00 : f32
    %153 = vector.broadcast %cst_38 : f32 to vector<2x32xf32>
    %154 = arith.addf %153, %152 : vector<2x32xf32>
    %155 = arith.divf %153, %154 : vector<2x32xf32>
    %156 = vector.extract_strided_slice %143 {offsets = [0, 64], sizes = [2, 32], strides = [1, 1]} : vector<2x128xf32> to vector<2x32xf32>
    %157 = math.tanh %156 : vector<2x32xf32>
    %158 = vector.extract_strided_slice %143 {offsets = [0, 96], sizes = [2, 32], strides = [1, 1]} : vector<2x128xf32> to vector<2x32xf32>
    %159 = arith.negf %158 : vector<2x32xf32>
    %160 = math.exp %159 : vector<2x32xf32>
    %cst_39 = arith.constant 1.000000e+00 : f32
    %161 = vector.broadcast %cst_39 : f32 to vector<2x32xf32>
    %162 = arith.addf %161, %160 : vector<2x32xf32>
    %163 = arith.divf %161, %162 : vector<2x32xf32>
    %164 = arith.mulf %155, %132 : vector<2x32xf32>
    %165 = arith.mulf %149, %157 : vector<2x32xf32>
    %166 = arith.addf %164, %165 : vector<2x32xf32>
    %167 = math.tanh %166 : vector<2x32xf32>
    %168 = arith.mulf %163, %167 : vector<2x32xf32>
    %169 = arith.index_cast %c4_i32 : i32 to index
    %c0_40 = arith.constant 0 : index
    %c0_41 = arith.constant 0 : index
    %170 = vector.load %arg2[%169, %c0_40, %c0_41] : memref<8x2x32xf32, #tpu.memory_space<vmem>>, vector<1x2x32xf32>
    %171 = vector.shape_cast %170 : vector<1x2x32xf32> to vector<2x32xf32>
    %172 = vector.shape_cast %168 : vector<2x32xf32> to vector<1x2x32xf32>
    tpu.vector_store %arg2[%169, %c0_40, %c0_41], %172 {strides = array<i32>} : memref<8x2x32xf32, #tpu.memory_space<vmem>>, vector<1x2x32xf32>,
    %c5_i32 = arith.constant 5 : i32
    %173 = arith.index_cast %c5_i32 : i32 to index
    %c0_42 = arith.constant 0 : index
    %c0_43 = arith.constant 0 : index
    %174 = vector.load %arg0[%173, %c0_42, %c0_43] : memref<8x2x128xf32, #tpu.memory_space<vmem>>, vector<1x2x128xf32>
    %175 = vector.shape_cast %174 : vector<1x2x128xf32> to vector<2x128xf32>
    %cst_44 = arith.constant dense<0.000000e+00> : vector<2x128xf32>
    %176 = tpu.matmul %168, %0, %cst_44 {dimension_numbers = #tpu.dot_dimension_numbers<[1], [0], [0], [1], [0, 0, 1, 1], [], []>, precision = #tpu.contract_precision<fp32>} : vector<2x32xf32>, vector<32x128xf32>, vector<2x128xf32> -> vector<2x128xf32>
    %177 = arith.addf %175, %176 : vector<2x128xf32>
    %178 = vector.extract_strided_slice %177 {offsets = [0, 0], sizes = [2, 32], strides = [1, 1]} : vector<2x128xf32> to vector<2x32xf32>
    %179 = arith.negf %178 : vector<2x32xf32>
    %180 = math.exp %179 : vector<2x32xf32>
    %cst_45 = arith.constant 1.000000e+00 : f32
    %181 = vector.broadcast %cst_45 : f32 to vector<2x32xf32>
    %182 = arith.addf %181, %180 : vector<2x32xf32>
    %183 = arith.divf %181, %182 : vector<2x32xf32>
    %184 = vector.extract_strided_slice %177 {offsets = [0, 32], sizes = [2, 32], strides = [1, 1]} : vector<2x128xf32> to vector<2x32xf32>
    %185 = arith.negf %184 : vector<2x32xf32>
    %186 = math.exp %185 : vector<2x32xf32>
    %cst_46 = arith.constant 1.000000e+00 : f32
    %187 = vector.broadcast %cst_46 : f32 to vector<2x32xf32>
    %188 = arith.addf %187, %186 : vector<2x32xf32>
    %189 = arith.divf %187, %188 : vector<2x32xf32>
    %190 = vector.extract_strided_slice %177 {offsets = [0, 64], sizes = [2, 32], strides = [1, 1]} : vector<2x128xf32> to vector<2x32xf32>
    %191 = math.tanh %190 : vector<2x32xf32>
    %192 = vector.extract_strided_slice %177 {offsets = [0, 96], sizes = [2, 32], strides = [1, 1]} : vector<2x128xf32> to vector<2x32xf32>
    %193 = arith.negf %192 : vector<2x32xf32>
    %194 = math.exp %193 : vector<2x32xf32>
    %cst_47 = arith.constant 1.000000e+00 : f32
    %195 = vector.broadcast %cst_47 : f32 to vector<2x32xf32>
    %196 = arith.addf %195, %194 : vector<2x32xf32>
    %197 = arith.divf %195, %196 : vector<2x32xf32>
    %198 = arith.mulf %189, %166 : vector<2x32xf32>
    %199 = arith.mulf %183, %191 : vector<2x32xf32>
    %200 = arith.addf %198, %199 : vector<2x32xf32>
    %201 = math.tanh %200 : vector<2x32xf32>
    %202 = arith.mulf %197, %201 : vector<2x32xf32>
    %203 = arith.index_cast %c5_i32 : i32 to index
    %c0_48 = arith.constant 0 : index
    %c0_49 = arith.constant 0 : index
    %204 = vector.load %arg2[%203, %c0_48, %c0_49] : memref<8x2x32xf32, #tpu.memory_space<vmem>>, vector<1x2x32xf32>
    %205 = vector.shape_cast %204 : vector<1x2x32xf32> to vector<2x32xf32>
    %206 = vector.shape_cast %202 : vector<2x32xf32> to vector<1x2x32xf32>
    tpu.vector_store %arg2[%203, %c0_48, %c0_49], %206 {strides = array<i32>} : memref<8x2x32xf32, #tpu.memory_space<vmem>>, vector<1x2x32xf32>,
    %c6_i32 = arith.constant 6 : i32
    %207 = arith.index_cast %c6_i32 : i32 to index
    %c0_50 = arith.constant 0 : index
    %c0_51 = arith.constant 0 : index
    %208 = vector.load %arg0[%207, %c0_50, %c0_51] : memref<8x2x128xf32, #tpu.memory_space<vmem>>, vector<1x2x128xf32>
    %209 = vector.shape_cast %208 : vector<1x2x128xf32> to vector<2x128xf32>
    %cst_52 = arith.constant dense<0.000000e+00> : vector<2x128xf32>
    %210 = tpu.matmul %202, %0, %cst_52 {dimension_numbers = #tpu.dot_dimension_numbers<[1], [0], [0], [1], [0, 0, 1, 1], [], []>, precision = #tpu.contract_precision<fp32>} : vector<2x32xf32>, vector<32x128xf32>, vector<2x128xf32> -> vector<2x128xf32>
    %211 = arith.addf %209, %210 : vector<2x128xf32>
    %212 = vector.extract_strided_slice %211 {offsets = [0, 0], sizes = [2, 32], strides = [1, 1]} : vector<2x128xf32> to vector<2x32xf32>
    %213 = arith.negf %212 : vector<2x32xf32>
    %214 = math.exp %213 : vector<2x32xf32>
    %cst_53 = arith.constant 1.000000e+00 : f32
    %215 = vector.broadcast %cst_53 : f32 to vector<2x32xf32>
    %216 = arith.addf %215, %214 : vector<2x32xf32>
    %217 = arith.divf %215, %216 : vector<2x32xf32>
    %218 = vector.extract_strided_slice %211 {offsets = [0, 32], sizes = [2, 32], strides = [1, 1]} : vector<2x128xf32> to vector<2x32xf32>
    %219 = arith.negf %218 : vector<2x32xf32>
    %220 = math.exp %219 : vector<2x32xf32>
    %cst_54 = arith.constant 1.000000e+00 : f32
    %221 = vector.broadcast %cst_54 : f32 to vector<2x32xf32>
    %222 = arith.addf %221, %220 : vector<2x32xf32>
    %223 = arith.divf %221, %222 : vector<2x32xf32>
    %224 = vector.extract_strided_slice %211 {offsets = [0, 64], sizes = [2, 32], strides = [1, 1]} : vector<2x128xf32> to vector<2x32xf32>
    %225 = math.tanh %224 : vector<2x32xf32>
    %226 = vector.extract_strided_slice %211 {offsets = [0, 96], sizes = [2, 32], strides = [1, 1]} : vector<2x128xf32> to vector<2x32xf32>
    %227 = arith.negf %226 : vector<2x32xf32>
    %228 = math.exp %227 : vector<2x32xf32>
    %cst_55 = arith.constant 1.000000e+00 : f32
    %229 = vector.broadcast %cst_55 : f32 to vector<2x32xf32>
    %230 = arith.addf %229, %228 : vector<2x32xf32>
    %231 = arith.divf %229, %230 : vector<2x32xf32>
    %232 = arith.mulf %223, %200 : vector<2x32xf32>
    %233 = arith.mulf %217, %225 : vector<2x32xf32>
    %234 = arith.addf %232, %233 : vector<2x32xf32>
    %235 = math.tanh %234 : vector<2x32xf32>
    %236 = arith.mulf %231, %235 : vector<2x32xf32>
    %237 = arith.index_cast %c6_i32 : i32 to index
    %c0_56 = arith.constant 0 : index
    %c0_57 = arith.constant 0 : index
    %238 = vector.load %arg2[%237, %c0_56, %c0_57] : memref<8x2x32xf32, #tpu.memory_space<vmem>>, vector<1x2x32xf32>
    %239 = vector.shape_cast %238 : vector<1x2x32xf32> to vector<2x32xf32>
    %240 = vector.shape_cast %236 : vector<2x32xf32> to vector<1x2x32xf32>
    tpu.vector_store %arg2[%237, %c0_56, %c0_57], %240 {strides = array<i32>} : memref<8x2x32xf32, #tpu.memory_space<vmem>>, vector<1x2x32xf32>,
    %c7_i32 = arith.constant 7 : i32
    %241 = arith.index_cast %c7_i32 : i32 to index
    %c0_58 = arith.constant 0 : index
    %c0_59 = arith.constant 0 : index
    %242 = vector.load %arg0[%241, %c0_58, %c0_59] : memref<8x2x128xf32, #tpu.memory_space<vmem>>, vector<1x2x128xf32>
    %243 = vector.shape_cast %242 : vector<1x2x128xf32> to vector<2x128xf32>
    %cst_60 = arith.constant dense<0.000000e+00> : vector<2x128xf32>
    %244 = tpu.matmul %236, %0, %cst_60 {dimension_numbers = #tpu.dot_dimension_numbers<[1], [0], [0], [1], [0, 0, 1, 1], [], []>, precision = #tpu.contract_precision<fp32>} : vector<2x32xf32>, vector<32x128xf32>, vector<2x128xf32> -> vector<2x128xf32>
    %245 = arith.addf %243, %244 : vector<2x128xf32>
    %246 = vector.extract_strided_slice %245 {offsets = [0, 0], sizes = [2, 32], strides = [1, 1]} : vector<2x128xf32> to vector<2x32xf32>
    %247 = arith.negf %246 : vector<2x32xf32>
    %248 = math.exp %247 : vector<2x32xf32>
    %cst_61 = arith.constant 1.000000e+00 : f32
    %249 = vector.broadcast %cst_61 : f32 to vector<2x32xf32>
    %250 = arith.addf %249, %248 : vector<2x32xf32>
    %251 = arith.divf %249, %250 : vector<2x32xf32>
    %252 = vector.extract_strided_slice %245 {offsets = [0, 32], sizes = [2, 32], strides = [1, 1]} : vector<2x128xf32> to vector<2x32xf32>
    %253 = arith.negf %252 : vector<2x32xf32>
    %254 = math.exp %253 : vector<2x32xf32>
    %cst_62 = arith.constant 1.000000e+00 : f32
    %255 = vector.broadcast %cst_62 : f32 to vector<2x32xf32>
    %256 = arith.addf %255, %254 : vector<2x32xf32>
    %257 = arith.divf %255, %256 : vector<2x32xf32>
    %258 = vector.extract_strided_slice %245 {offsets = [0, 64], sizes = [2, 32], strides = [1, 1]} : vector<2x128xf32> to vector<2x32xf32>
    %259 = math.tanh %258 : vector<2x32xf32>
    %260 = vector.extract_strided_slice %245 {offsets = [0, 96], sizes = [2, 32], strides = [1, 1]} : vector<2x128xf32> to vector<2x32xf32>
    %261 = arith.negf %260 : vector<2x32xf32>
    %262 = math.exp %261 : vector<2x32xf32>
    %cst_63 = arith.constant 1.000000e+00 : f32
    %263 = vector.broadcast %cst_63 : f32 to vector<2x32xf32>
    %264 = arith.addf %263, %262 : vector<2x32xf32>
    %265 = arith.divf %263, %264 : vector<2x32xf32>
    %266 = arith.mulf %257, %234 : vector<2x32xf32>
    %267 = arith.mulf %251, %259 : vector<2x32xf32>
    %268 = arith.addf %266, %267 : vector<2x32xf32>
    %269 = math.tanh %268 : vector<2x32xf32>
    %270 = arith.mulf %265, %269 : vector<2x32xf32>
    %271 = arith.index_cast %c7_i32 : i32 to index
    %c0_64 = arith.constant 0 : index
    %c0_65 = arith.constant 0 : index
    %272 = vector.load %arg2[%271, %c0_64, %c0_65] : memref<8x2x32xf32, #tpu.memory_space<vmem>>, vector<1x2x32xf32>
    %273 = vector.shape_cast %272 : vector<1x2x32xf32> to vector<2x32xf32>
    %274 = vector.shape_cast %270 : vector<2x32xf32> to vector<1x2x32xf32>
    tpu.vector_store %arg2[%271, %c0_64, %c0_65], %274 {strides = array<i32>} : memref<8x2x32xf32, #tpu.memory_space<vmem>>, vector<1x2x32xf32>,
    %c8_i32 = arith.constant 8 : i32
    return
  }
}

module attributes {stable_mosaic.version = 11 : i64} {
  func.func @attn_kernel(%arg0: memref<2x8x32xf32, #tpu.memory_space<vmem>>, %arg1: memref<32x32xf32, #tpu.memory_space<vmem>>, %arg2: memref<1x32xf32, #tpu.memory_space<vmem>>, %arg3: memref<2x32xf32, #tpu.memory_space<vmem>>, %arg4: memref<2x32xf32, #tpu.memory_space<vmem>>) attributes {dimension_semantics = [], scalar_prefetch = 0 : i64, scratch_operands = 0 : i64, tpu.core_type = #tpu.core_type<tc>} {
    %c0 = arith.constant 0 : index
    %c0_0 = arith.constant 0 : index
    %c0_1 = arith.constant 0 : index
    %0 = vector.load %arg0[%c0, %c0_0, %c0_1] : memref<2x8x32xf32, #tpu.memory_space<vmem>>, vector<2x8x32xf32>
    %c0_2 = arith.constant 0 : index
    %c0_3 = arith.constant 0 : index
    %1 = vector.load %arg1[%c0_2, %c0_3] : memref<32x32xf32, #tpu.memory_space<vmem>>, vector<32x32xf32>
    %2 = vector.shape_cast %1 : vector<32x32xf32> to vector<1x32x32xf32>
    %3 = vector.broadcast %2 : vector<1x32x32xf32> to vector<2x32x32xf32>
    "tpu.trace_start"() <{level = 10 : i32, message = "bsh,bhk->bsk"}> : () -> ()
    %cst = arith.constant dense<0.000000e+00> : vector<2x8x32xf32>
    %4 = tpu.matmul %0, %3, %cst {dimension_numbers = #tpu.dot_dimension_numbers<[2], [1], [1], [2], [0, 0, 0, 1, 1, 2], [0], [0]>, precision = #tpu.contract_precision<fp32>} : vector<2x8x32xf32>, vector<2x32x32xf32>, vector<2x8x32xf32> -> vector<2x8x32xf32>
    "tpu.trace_stop"() : () -> ()
    %c0_4 = arith.constant 0 : index
    %c0_5 = arith.constant 0 : index
    %5 = vector.load %arg2[%c0_4, %c0_5] : memref<1x32xf32, #tpu.memory_space<vmem>>, vector<1x32xf32>
    %6 = vector.shape_cast %5 : vector<1x32xf32> to vector<1x1x32xf32>
    %7 = vector.broadcast %6 : vector<1x1x32xf32> to vector<2x8x32xf32>
    %8 = arith.addf %4, %7 : vector<2x8x32xf32>
    %9 = math.tanh %8 : vector<2x8x32xf32>
    %c0_6 = arith.constant 0 : index
    %c0_7 = arith.constant 0 : index
    %10 = vector.load %arg3[%c0_6, %c0_7] : memref<2x32xf32, #tpu.memory_space<vmem>>, vector<2x32xf32>
    %11 = vector.shape_cast %10 : vector<2x32xf32> to vector<2x1x32xf32>
    %12 = vector.broadcast %11 : vector<2x1x32xf32> to vector<2x8x32xf32>
    %13 = arith.mulf %9, %12 : vector<2x8x32xf32>
    %cst_8 = arith.constant dense<0.000000e+00> : vector<2x8xf32>
    %14 = vector.multi_reduction <add>, %13, %cst_8 [2] : vector<2x8x32xf32> to vector<2x8xf32>
    %15 = vector.shape_cast %14 : vector<2x8xf32> to vector<2x8x1xf32>
    %cst_9 = arith.constant dense<0xFF800000> : vector<2x1xf32>
    %16 = vector.multi_reduction <maximumf>, %15, %cst_9 [1] : vector<2x8x1xf32> to vector<2x1xf32>
    %17 = vector.shape_cast %16 : vector<2x1xf32> to vector<2x1x1xf32>
    %18 = vector.broadcast %17 : vector<2x1x1xf32> to vector<2x8x1xf32>
    %19 = arith.subf %15, %18 : vector<2x8x1xf32>
    %20 = math.exp %19 : vector<2x8x1xf32>
    %cst_10 = arith.constant dense<0.000000e+00> : vector<2x1xf32>
    %21 = vector.multi_reduction <add>, %20, %cst_10 [1] : vector<2x8x1xf32> to vector<2x1xf32>
    %22 = vector.shape_cast %21 : vector<2x1xf32> to vector<2x1x1xf32>
    %23 = vector.broadcast %22 : vector<2x1x1xf32> to vector<2x8x1xf32>
    %24 = arith.divf %20, %23 : vector<2x8x1xf32>
    %25 = vector.broadcast %24 : vector<2x8x1xf32> to vector<2x8x32xf32>
    %26 = arith.mulf %0, %25 : vector<2x8x32xf32>
    %cst_11 = arith.constant dense<0.000000e+00> : vector<2x32xf32>
    %27 = vector.multi_reduction <add>, %26, %cst_11 [1] : vector<2x8x32xf32> to vector<2x32xf32>
    %c0_12 = arith.constant 0 : index
    %c0_13 = arith.constant 0 : index
    %28 = vector.load %arg4[%c0_12, %c0_13] : memref<2x32xf32, #tpu.memory_space<vmem>>, vector<2x32xf32>
    tpu.vector_store %arg4[%c0_12, %c0_13], %27 {strides = array<i32>} : memref<2x32xf32, #tpu.memory_space<vmem>>, vector<2x32xf32>,
    return
  }
}

</mosaic_0001>

<llo_original>
// kernel: attention_lstm_forward.3
$region0: #{attention_lstm_forward.3}
  #allocation0 [shape = 'u32[]', space=smem, size = 0x4, offset = 0x4, fixed_abs, tag = 'smem constant byte address 0x4 - core index']
  #allocation1 [shape = 'u32[72,128]{1,0:T(1,128)}', space=vmem, size = 0x9000, scoped, tag = 'internal scratch']
  %s0 = inlined_call_operand.vmem [shape: f32[2,8,32], index: 0, kind: input, shape index: {}]
  %s1 = inlined_call_operand.vmem [shape: f32[32,32], index: 1, kind: input, shape index: {}]
  %s2 = inlined_call_operand.vmem [shape: f32[1,32], index: 2, kind: input, shape index: {}]
  %s3 = inlined_call_operand.vmem [shape: f32[2,32], index: 3, kind: input, shape index: {}]
  %s4 = inlined_call_operand.hbm [shape: f32[2,32], index: 4, kind: output, shape index: {}]
  %s5 = sld [smem:[#allocation0]]
  $region26: #{attention_lstm_forward.3} parent=0
    _
  %s7 = ssub.s32 1, %s5
  %s8 = scalar_select 0, %s7, %s5
  $region1: #{attention_lstm_forward.3} parent=0
    #allocation2 [shape = 'u8[1024]{0}', space=vmem, size = 0x400, scoped, tag = 'output window, operand 0, single buffered']
    #allocation3 [shape = 's32[1]{0}', space=sflag, size = 0x4, scoped, tag = 'scoped memory for attention_lstm_forward.3']
    %9 = vsyncpa [#allocation3], 0
    // Predicated region
    $region2: #{attention_lstm_forward.3} parent=1 // pred_check
      _
    $region3: #{attention_lstm_forward.3} parent=1 // pred_check_branch
      %11 = sbr.rel (0) target = $region5
    $region4: #{attention_lstm_forward.3} parent=1 // pred_region
      _
    $region5: #{attention_lstm_forward.3} parent=1 // pred_fallthru
      _
    // Predicated region
    $region6: #{attention_lstm_forward.3} parent=1 // pred_check
      _
    $region7: #{attention_lstm_forward.3} parent=1 // pred_check_branch
      %13 = sbr.rel (0) target = $region9
    $region8: #{attention_lstm_forward.3} parent=1 // pred_region
      _
    $region9: #{attention_lstm_forward.3} parent=1 // pred_fallthru
      _
    // Predicated region
    $region10: #{attention_lstm_forward.3} parent=1 // pred_check
      _
    $region11: #{attention_lstm_forward.3} parent=1 // pred_check_branch
      %15 = sbr.rel (0) target = $region13
    $region12: #{attention_lstm_forward.3} parent=1 // pred_region
      _
    $region13: #{attention_lstm_forward.3} parent=1 // pred_fallthru
      _
    // Predicated region
    $region14: #{attention_lstm_forward.3} parent=1 // pred_check
      _
    $region15: #{attention_lstm_forward.3} parent=1 // pred_check_branch
      %17 = sbr.rel (0) target = $region17
    $region16: #{attention_lstm_forward.3} parent=1 // pred_region
      _
    $region17: #{attention_lstm_forward.3} parent=1 // pred_fallthru
      _
    %v18 = vld [vmem:[%s0] sm:$0xff]
    %v19 = vld [vmem:[%s0 + $0x8] sm:$0xff]
    %v20 = vld [vmem:[%s1] sm:$0xff]
    %v21 = vld [vmem:[%s1 + $0x8] sm:$0xff]
    %v22 = vld [vmem:[%s1 + $0x10] sm:$0xff]
    %v23 = vld [vmem:[%s1 + $0x18] sm:$0xff]
    %v24 = vld [vmem:[%s2] sm:$0x1]
    %v26 = vperm.slane %v24, 0
    %vm28 = vcmask 261120
    %v30 = vsel %vm28, %v18, 0
    %32 = vmatpush.msra.mxu0 0.0
    %33 = vmatpush.msra.mxu0 0.0
    %34 = vmatpush.msra.mxu0 0.0
    %35 = vmatpush.msra.mxu0 0.0
    %36 = vmatpush.msra.mxu0 0.0
    %37 = vmatpush.msra.mxu0 0.0
    %38 = vmatpush.msra.mxu0 0.0
    %39 = vmatpush.msra.mxu0 0.0
    %40 = vmatpush.msra.mxu0 0.0
    %41 = vmatpush.msra.mxu0 0.0
    %42 = vmatpush.msra.mxu0 0.0
    %43 = vmatpush.msra.mxu0 0.0
    %v44 = vand.u32 %v23, 4294901760
    %45 = vmatpush.msra.mxu0 %v44
    %v46 = vand.u32 %v22, 4294901760
    %47 = vmatpush.msra.mxu0 %v46
    %v48 = vand.u32 %v21, 4294901760
    %49 = vmatpush.msra.mxu0 %v48
    %v50 = vand.u32 %v20, 4294901760
    %51 = vmatpush.msra.mxu0 %v50
    %v52 = vand.u32 %v30, 4294901760
    %v53 = vsub.f32 %v30, %v52
    %v54 = vand.u32 %v53, 4294901760
    %v55 = vsub.f32 %v53, %v54
    %v56 = vand.u32 %v55, 4294901760
    %57 = vmatmul.f32.gmra.mxu0 %v56
    %v58 = vpop.f32.mrf.mxu0
    %v59 = vadd.f32 %v26, %v58
    %60 = vdwg.mxu0
    %61 = vmatpush.msra.mxu0 0.0
    %62 = vmatpush.msra.mxu0 0.0
    %63 = vmatpush.msra.mxu0 0.0
    %64 = vmatpush.msra.mxu0 0.0
    %65 = vmatpush.msra.mxu0 0.0
    %66 = vmatpush.msra.mxu0 0.0
    %67 = vmatpush.msra.mxu0 0.0
    %68 = vmatpush.msra.mxu0 0.0
    %69 = vmatpush.msra.mxu0 0.0
    %70 = vmatpush.msra.mxu0 0.0
    %71 = vmatpush.msra.mxu0 0.0
    %72 = vmatpush.msra.mxu0 0.0
    %v73 = vand.u32 %v23, 4294901760
    %v74 = vsub.f32 %v23, %v73
    %v75 = vand.u32 %v74, 4294901760
    %v76 = vsub.f32 %v74, %v75
    %v77 = vand.u32 %v76, 4294901760
    %78 = vmatpush.msra.mxu0 %v77
    %v79 = vand.u32 %v22, 4294901760
    %v80 = vsub.f32 %v22, %v79
    %v81 = vand.u32 %v80, 4294901760
    %v82 = vsub.f32 %v80, %v81
    %v83 = vand.u32 %v82, 4294901760
    %84 = vmatpush.msra.mxu0 %v83
    %v85 = vand.u32 %v21, 4294901760
    %v86 = vsub.f32 %v21, %v85
    %v87 = vand.u32 %v86, 4294901760
    %v88 = vsub.f32 %v86, %v87
    %v89 = vand.u32 %v88, 4294901760
    %90 = vmatpush.msra.mxu0 %v89
    %v91 = vand.u32 %v20, 4294901760
    %v92 = vsub.f32 %v20, %v91
    %v93 = vand.u32 %v92, 4294901760
    %v94 = vsub.f32 %v92, %v93
    %v95 = vand.u32 %v94, 4294901760
    %96 = vmatpush.msra.mxu0 %v95
    %v97 = vand.u32 %v30, 4294901760
    %98 = vmatmul.f32.gmra.mxu0 %v97
    %v99 = vpop.f32.mrf.mxu0
    %v100 = vadd.f32 %v59, %v99
    %101 = vdwg.mxu0
    %102 = vmatpush.msra.mxu0 0.0
    %103 = vmatpush.msra.mxu0 0.0
    %104 = vmatpush.msra.mxu0 0.0
    %105 = vmatpush.msra.mxu0 0.0
    %106 = vmatpush.msra.mxu0 0.0
    %107 = vmatpush.msra.mxu0 0.0
    %108 = vmatpush.msra.mxu0 0.0
    %109 = vmatpush.msra.mxu0 0.0
    %110 = vmatpush.msra.mxu0 0.0
    %111 = vmatpush.msra.mxu0 0.0
    %112 = vmatpush.msra.mxu0 0.0
    %113 = vmatpush.msra.mxu0 0.0
    %v114 = vand.u32 %v23, 4294901760
    %v115 = vsub.f32 %v23, %v114
    %116 = vmatpush.msra.mxu0 %v115
    %v117 = vand.u32 %v22, 4294901760
    %v118 = vsub.f32 %v22, %v117
    %119 = vmatpush.msra.mxu0 %v118
    %v120 = vand.u32 %v21, 4294901760
    %v121 = vsub.f32 %v21, %v120
    %122 = vmatpush.msra.mxu0 %v121
    %v123 = vand.u32 %v20, 4294901760
    %v124 = vsub.f32 %v20, %v123
    %125 = vmatpush.msra.mxu0 %v124
    %v126 = vand.u32 %v30, 4294901760
    %v127 = vsub.f32 %v30, %v126
    %128 = vmatmul.f32.gmra.mxu0 %v127
    %v129 = vpop.f32.mrf.mxu0
    %v130 = vadd.f32 %v100, %v129
    %131 = vdwg.mxu0
    %132 = vmatpush.msra.mxu0 0.0
    %133 = vmatpush.msra.mxu0 0.0
    %134 = vmatpush.msra.mxu0 0.0
    %135 = vmatpush.msra.mxu0 0.0
    %136 = vmatpush.msra.mxu0 0.0
    %137 = vmatpush.msra.mxu0 0.0
    %138 = vmatpush.msra.mxu0 0.0
    %139 = vmatpush.msra.mxu0 0.0
    %140 = vmatpush.msra.mxu0 0.0
    %141 = vmatpush.msra.mxu0 0.0
    %142 = vmatpush.msra.mxu0 0.0
    %143 = vmatpush.msra.mxu0 0.0
    %v144 = vand.u32 %v23, 4294901760
    %145 = vmatpush.msra.mxu0 %v144
    %v146 = vand.u32 %v22, 4294901760
    %147 = vmatpush.msra.mxu0 %v146
    %v148 = vand.u32 %v21, 4294901760
    %149 = vmatpush.msra.mxu0 %v148
    %v150 = vand.u32 %v20, 4294901760
    %151 = vmatpush.msra.mxu0 %v150
    %v152 = vand.u32 %v30, 4294901760
    %v153 = vsub.f32 %v30, %v152
    %v154 = vand.u32 %v153, 4294901760
    %155 = vmatmul.f32.gmra.mxu0 %v154
    %v156 = vpop.f32.mrf.mxu0
    %v157 = vadd.f32 %v130, %v156
    %158 = vdwg.mxu0
    %159 = vmatpush.msra.mxu0 0.0
    %160 = vmatpush.msra.mxu0 0.0
    %161 = vmatpush.msra.mxu0 0.0
    %162 = vmatpush.msra.mxu0 0.0
    %163 = vmatpush.msra.mxu0 0.0
    %164 = vmatpush.msra.mxu0 0.0
    %165 = vmatpush.msra.mxu0 0.0
    %166 = vmatpush.msra.mxu0 0.0
    %167 = vmatpush.msra.mxu0 0.0
    %168 = vmatpush.msra.mxu0 0.0
    %169 = vmatpush.msra.mxu0 0.0
    %170 = vmatpush.msra.mxu0 0.0
    %v171 = vand.u32 %v23, 4294901760
    %v172 = vsub.f32 %v23, %v171
    %v173 = vand.u32 %v172, 4294901760
    %174 = vmatpush.msra.mxu0 %v173
    %v175 = vand.u32 %v22, 4294901760
    %v176 = vsub.f32 %v22, %v175
    %v177 = vand.u32 %v176, 4294901760
    %178 = vmatpush.msra.mxu0 %v177
    %v179 = vand.u32 %v21, 4294901760
    %v180 = vsub.f32 %v21, %v179
    %v181 = vand.u32 %v180, 4294901760
    %182 = vmatpush.msra.mxu0 %v181
    %v183 = vand.u32 %v20, 4294901760
    %v184 = vsub.f32 %v20, %v183
    %v185 = vand.u32 %v184, 4294901760
    %186 = vmatpush.msra.mxu0 %v185
    %v187 = vand.u32 %v30, 4294901760
    %188 = vmatmul.f32.gmra.mxu0 %v187
    %v189 = vpop.f32.mrf.mxu0
    %v190 = vadd.f32 %v157, %v189
    %191 = vdwg.mxu0
    %192 = vmatpush.msra.mxu0 0.0
    %193 = vmatpush.msra.mxu0 0.0
    %194 = vmatpush.msra.mxu0 0.0
    %195 = vmatpush.msra.mxu0 0.0
    %196 = vmatpush.msra.mxu0 0.0
    %197 = vmatpush.msra.mxu0 0.0
    %198 = vmatpush.msra.mxu0 0.0
    %199 = vmatpush.msra.mxu0 0.0
    %200 = vmatpush.msra.mxu0 0.0
    %201 = vmatpush.msra.mxu0 0.0
    %202 = vmatpush.msra.mxu0 0.0
    %203 = vmatpush.msra.mxu0 0.0
    %v204 = vand.u32 %v23, 4294901760
    %205 = vmatpush.msra.mxu0 %v204
    %v206 = vand.u32 %v22, 4294901760
    %207 = vmatpush.msra.mxu0 %v206
    %v208 = vand.u32 %v21, 4294901760
    %209 = vmatpush.msra.mxu0 %v208
    %v210 = vand.u32 %v20, 4294901760
    %211 = vmatpush.msra.mxu0 %v210
    %v212 = vand.u32 %v30, 4294901760
    %213 = vmatmul.f32.gmra.mxu0 %v212
    %v214 = vpop.f32.mrf.mxu0
    %v215 = vadd.f32 %v190, %v214
    %216 = vdwg.mxu0
    %v218 = vsel %vm28, %v19, 0
    %220 = vmatpush.msra.mxu0 0.0
    %221 = vmatpush.msra.mxu0 0.0
    %222 = vmatpush.msra.mxu0 0.0
    %223 = vmatpush.msra.mxu0 0.0
    %224 = vmatpush.msra.mxu0 0.0
    %225 = vmatpush.msra.mxu0 0.0
    %226 = vmatpush.msra.mxu0 0.0
    %227 = vmatpush.msra.mxu0 0.0
    %228 = vmatpush.msra.mxu0 0.0
    %229 = vmatpush.msra.mxu0 0.0
    %230 = vmatpush.msra.mxu0 0.0
    %231 = vmatpush.msra.mxu0 0.0
    %v232 = vand.u32 %v23, 4294901760
    %233 = vmatpush.msra.mxu0 %v232
    %v234 = vand.u32 %v22, 4294901760
    %235 = vmatpush.msra.mxu0 %v234
    %v236 = vand.u32 %v21, 4294901760
    %237 = vmatpush.msra.mxu0 %v236
    %v238 = vand.u32 %v20, 4294901760
    %239 = vmatpush.msra.mxu0 %v238
    %v240 = vand.u32 %v218, 4294901760
    %v241 = vsub.f32 %v218, %v240
    %v242 = vand.u32 %v241, 4294901760
    %v243 = vsub.f32 %v241, %v242
    %v244 = vand.u32 %v243, 4294901760
    %245 = vmatmul.f32.gmra.mxu0 %v244
    %v246 = vpop.f32.mrf.mxu0
    %v247 = vadd.f32 %v26, %v246
    %248 = vdwg.mxu0
    %249 = vmatpush.msra.mxu0 0.0
    %250 = vmatpush.msra.mxu0 0.0
    %251 = vmatpush.msra.mxu0 0.0
    %252 = vmatpush.msra.mxu0 0.0
    %253 = vmatpush.msra.mxu0 0.0
    %254 = vmatpush.msra.mxu0 0.0
    %255 = vmatpush.msra.mxu0 0.0
    %256 = vmatpush.msra.mxu0 0.0
    %257 = vmatpush.msra.mxu0 0.0
    %258 = vmatpush.msra.mxu0 0.0
    %259 = vmatpush.msra.mxu0 0.0
    %260 = vmatpush.msra.mxu0 0.0
    %v261 = vand.u32 %v23, 4294901760
    %v262 = vsub.f32 %v23, %v261
    %v263 = vand.u32 %v262, 4294901760
    %v264 = vsub.f32 %v262, %v263
    %v265 = vand.u32 %v264, 4294901760
    %266 = vmatpush.msra.mxu0 %v265
    %v267 = vand.u32 %v22, 4294901760
    %v268 = vsub.f32 %v22, %v267
    %v269 = vand.u32 %v268, 4294901760
    %v270 = vsub.f32 %v268, %v269
    %v271 = vand.u32 %v270, 4294901760
    %272 = vmatpush.msra.mxu0 %v271
    %v273 = vand.u32 %v21, 4294901760
    %v274 = vsub.f32 %v21, %v273
    %v275 = vand.u32 %v274, 4294901760
    %v276 = vsub.f32 %v274, %v275
    %v277 = vand.u32 %v276, 4294901760
    %278 = vmatpush.msra.mxu0 %v277
    %v279 = vand.u32 %v20, 4294901760
    %v280 = vsub.f32 %v20, %v279
    %v281 = vand.u32 %v280, 4294901760
    %v282 = vsub.f32 %v280, %v281
    %v283 = vand.u32 %v282, 4294901760
    %284 = vmatpush.msra.mxu0 %v283
    %v285 = vand.u32 %v218, 4294901760
    %286 = vmatmul.f32.gmra.mxu0 %v285
    %v287 = vpop.f32.mrf.mxu0
    %v288 = vadd.f32 %v247, %v287
    %289 = vdwg.mxu0
    %290 = vmatpush.msra.mxu0 0.0
    %291 = vmatpush.msra.mxu0 0.0
    %292 = vmatpush.msra.mxu0 0.0
    %293 = vmatpush.msra.mxu0 0.0
    %294 = vmatpush.msra.mxu0 0.0
    %295 = vmatpush.msra.mxu0 0.0
    %296 = vmatpush.msra.mxu0 0.0
    %297 = vmatpush.msra.mxu0 0.0
    %298 = vmatpush.msra.mxu0 0.0
    %299 = vmatpush.msra.mxu0 0.0
    %300 = vmatpush.msra.mxu0 0.0
    %301 = vmatpush.msra.mxu0 0.0
    %v302 = vand.u32 %v23, 4294901760
    %v303 = vsub.f32 %v23, %v302
    %304 = vmatpush.msra.mxu0 %v303
    %v305 = vand.u32 %v22, 4294901760
    %v306 = vsub.f32 %v22, %v305
    %307 = vmatpush.msra.mxu0 %v306
    %v308 = vand.u32 %v21, 4294901760
    %v309 = vsub.f32 %v21, %v308
    %310 = vmatpush.msra.mxu0 %v309
    %v311 = vand.u32 %v20, 4294901760
    %v312 = vsub.f32 %v20, %v311
    %313 = vmatpush.msra.mxu0 %v312
    %v314 = vand.u32 %v218, 4294901760
    %v315 = vsub.f32 %v218, %v314
    %316 = vmatmul.f32.gmra.mxu0 %v315
    %v317 = vpop.f32.mrf.mxu0
    %v318 = vadd.f32 %v288, %v317
    %319 = vdwg.mxu0
    %320 = vmatpush.msra.mxu0 0.0
    %321 = vmatpush.msra.mxu0 0.0
    %322 = vmatpush.msra.mxu0 0.0
    %323 = vmatpush.msra.mxu0 0.0
    %324 = vmatpush.msra.mxu0 0.0
    %325 = vmatpush.msra.mxu0 0.0
    %326 = vmatpush.msra.mxu0 0.0
    %327 = vmatpush.msra.mxu0 0.0
    %328 = vmatpush.msra.mxu0 0.0
    %329 = vmatpush.msra.mxu0 0.0
    %330 = vmatpush.msra.mxu0 0.0
    %331 = vmatpush.msra.mxu0 0.0
    %v332 = vand.u32 %v23, 4294901760
    %333 = vmatpush.msra.mxu0 %v332
    %v334 = vand.u32 %v22, 4294901760
    %335 = vmatpush.msra.mxu0 %v334
    %v336 = vand.u32 %v21, 4294901760
    %337 = vmatpush.msra.mxu0 %v336
    %v338 = vand.u32 %v20, 4294901760
    %339 = vmatpush.msra.mxu0 %v338
    %v340 = vand.u32 %v218, 4294901760
    %v341 = vsub.f32 %v218, %v340
    %v342 = vand.u32 %v341, 4294901760
    %343 = vmatmul.f32.gmra.mxu0 %v342
    %v344 = vpop.f32.mrf.mxu0
    %v345 = vadd.f32 %v318, %v344
    %346 = vdwg.mxu0
    %347 = vmatpush.msra.mxu0 0.0
    %348 = vmatpush.msra.mxu0 0.0
    %349 = vmatpush.msra.mxu0 0.0
    %350 = vmatpush.msra.mxu0 0.0
    %351 = vmatpush.msra.mxu0 0.0
    %352 = vmatpush.msra.mxu0 0.0
    %353 = vmatpush.msra.mxu0 0.0
    %354 = vmatpush.msra.mxu0 0.0
    %355 = vmatpush.msra.mxu0 0.0
    %356 = vmatpush.msra.mxu0 0.0
    %357 = vmatpush.msra.mxu0 0.0
    %358 = vmatpush.msra.mxu0 0.0
    %v359 = vand.u32 %v23, 4294901760
    %v360 = vsub.f32 %v23, %v359
    %v361 = vand.u32 %v360, 4294901760
    %362 = vmatpush.msra.mxu0 %v361
    %v363 = vand.u32 %v22, 4294901760
    %v364 = vsub.f32 %v22, %v363
    %v365 = vand.u32 %v364, 4294901760
    %366 = vmatpush.msra.mxu0 %v365
    %v367 = vand.u32 %v21, 4294901760
    %v368 = vsub.f32 %v21, %v367
    %v369 = vand.u32 %v368, 4294901760
    %370 = vmatpush.msra.mxu0 %v369
    %v371 = vand.u32 %v20, 4294901760
    %v372 = vsub.f32 %v20, %v371
    %v373 = vand.u32 %v372, 4294901760
    %374 = vmatpush.msra.mxu0 %v373
    %v375 = vand.u32 %v218, 4294901760
    %376 = vmatmul.f32.gmra.mxu0 %v375
    %v377 = vpop.f32.mrf.mxu0
    %v378 = vadd.f32 %v345, %v377
    %379 = vdwg.mxu0
    %380 = vmatpush.msra.mxu0 0.0
    %381 = vmatpush.msra.mxu0 0.0
    %382 = vmatpush.msra.mxu0 0.0
    %383 = vmatpush.msra.mxu0 0.0
    %384 = vmatpush.msra.mxu0 0.0
    %385 = vmatpush.msra.mxu0 0.0
    %386 = vmatpush.msra.mxu0 0.0
    %387 = vmatpush.msra.mxu0 0.0
    %388 = vmatpush.msra.mxu0 0.0
    %389 = vmatpush.msra.mxu0 0.0
    %390 = vmatpush.msra.mxu0 0.0
    %391 = vmatpush.msra.mxu0 0.0
    %v392 = vand.u32 %v23, 4294901760
    %393 = vmatpush.msra.mxu0 %v392
    %v394 = vand.u32 %v22, 4294901760
    %395 = vmatpush.msra.mxu0 %v394
    %v396 = vand.u32 %v21, 4294901760
    %397 = vmatpush.msra.mxu0 %v396
    %v398 = vand.u32 %v20, 4294901760
    %399 = vmatpush.msra.mxu0 %v398
    %v400 = vand.u32 %v218, 4294901760
    %401 = vmatmul.f32.gmra.mxu0 %v400
    %v402 = vpop.f32.mrf.mxu0
    %v403 = vadd.f32 %v378, %v402
    %404 = vdwg.mxu0
    %v405 = vtanh.pop %v215
    %v406 = vtanh.pop %v403
    %v407 = vld [vmem:[%s3] sm:$0x3]
    %v409 = vrot.slane %v407, 1
    %v410 = vperm.slane %v407, 0
    %v411 = vperm.slane %v409, 0
    %v414 = vmul.f32 %v405, %v410
    %v415 = vmul.f32 %v406, %v411
    %v416 = vsel %vm28, %v414, 0.0
    %417 = vadd.xlane.f32.xlu0 %v416
    %v418 = vpop.xlane.xlu0 %417
    %v419 = vsel %vm28, %v415, 0.0
    %420 = vadd.xlane.f32.xlu0 %v419
    %v421 = vpop.xlane.xlu0 %420
    %v422 = vrot.slane %v418, 4
    %v423 = vmax.f32 %v418, %v422
    %v424 = vrot.slane %v423, 2
    %v425 = vmax.f32 %v423, %v424
    %v426 = vrot.slane %v425, 1
    %v427 = vmax.f32 %v425, %v426
    %v428 = vrot.slane %v421, 4
    %v429 = vmax.f32 %v421, %v428
    %v430 = vrot.slane %v429, 2
    %v431 = vmax.f32 %v429, %v430
    %v432 = vrot.slane %v431, 1
    %v433 = vmax.f32 %v431, %v432
    %v434 = vsub.f32 %v418, %v427
    %v435 = vsub.f32 %v421, %v433
    %v436 = vmul.f32 %v434, 1.442695
    %v437 = vpow.pop %v436
    %v438 = vmul.f32 %v435, 1.442695
    %v439 = vpow.pop %v438
    %v440 = vrot.slane %v437, 4
    %v441 = vadd.f32 %v437, %v440
    %v442 = vrot.slane %v441, 2
    %v443 = vadd.f32 %v441, %v442
    %v444 = vrot.slane %v443, 1
    %v445 = vadd.f32 %v443, %v444
    %v446 = vrot.slane %v439, 4
    %v447 = vadd.f32 %v439, %v446
    %v448 = vrot.slane %v447, 2
    %v449 = vadd.f32 %v447, %v448
    %v450 = vrot.slane %v449, 1
    %v451 = vadd.f32 %v449, %v450
    %v452 = vrcp.pop %v445
    %v453 = vmul.f32 %v445, %v452
    %v454 = vsub.f32 1.0, %v453
    %v455 = vmul.f32 %v452, %v454
    %v456 = vadd.f32 %v452, %v455
    %vm457 = vweird.f32 %v445
    %vm458 = vweird.f32 %v452
    %vm459 = vmor %vm457, %vm458
    %v460 = vsel %vm459, %v452, %v456
    %v461 = vand.u32 2147483647, %v445
    %vm462 = vcmp.eq.f32.partialorder %v461, 8.507059e+37
    %v463 = vand.u32 %v445, 2147483648
    %v464 = vor.u32 1.1754944e-38, %v463
    %v465 = vsel %vm462, %v464, %v460
    %v466 = vmul.f32 %v437, %v465
    %v467 = vrcp.pop %v451
    %v468 = vmul.f32 %v451, %v467
    %v469 = vsub.f32 1.0, %v468
    %v470 = vmul.f32 %v467, %v469
    %v471 = vadd.f32 %v467, %v470
    %vm472 = vweird.f32 %v451
    %vm473 = vweird.f32 %v467
    %vm474 = vmor %vm472, %vm473
    %v475 = vsel %vm474, %v467, %v471
    %v476 = vand.u32 2147483647, %v451
    %vm477 = vcmp.eq.f32.partialorder %v476, 8.507059e+37
    %v478 = vand.u32 %v451, 2147483648
    %v479 = vor.u32 1.1754944e-38, %v478
    %v480 = vsel %vm477, %v479, %v475
    %v481 = vmul.f32 %v439, %v480
    %v482 = vmul.f32 %v18, %v466
    %v483 = vmul.f32 %v19, %v481
    %v484 = vsel %vm28, %v482, 0.0
    %v485 = vrot.slane %v484, 4
    %v486 = vadd.f32 %v484, %v485
    %v487 = vrot.slane %v486, 2
    %v488 = vadd.f32 %v486, %v487
    %v489 = vrot.slane %v488, 1
    %v490 = vadd.f32 %v488, %v489
    %v491 = vsel %vm28, %v483, 0.0
    %v492 = vrot.slane %v491, 4
    %v493 = vadd.f32 %v491, %v492
    %v494 = vrot.slane %v493, 2
    %v495 = vadd.f32 %v493, %v494
    %v496 = vrot.slane %v495, 1
    %v497 = vadd.f32 %v495, %v496
    %vm500 = vcmask 1041409
    %v501 = vsel %vm500, %v497, %v490
    %vm503 = vcmask 254976
    %504 = vst.msk [vmem:[#allocation2] sm:$0x3] %vm503, %v501
    // Predicated region
    $region18: #{attention_lstm_forward.3} parent=1 // pred_check
      _
    $region19: #{attention_lstm_forward.3} parent=1 // pred_check_branch
      %506 = sbr.rel (0) target = $region21
    $region20: #{attention_lstm_forward.3} parent=1 // pred_region
      %508 = vsyncadd [#allocation3], 0
      %s510 = sshll.u32 [#allocation2], 4
      %s511 = int_to_ptr.vmem [resolvable:$true] %s510
      %s512 = sshll.u32 %s4, 4
      %s513 = int_to_ptr.hbm [resolvable:$true] %s512
      %515 = dma.vmem_to_hbm [thread:$0]  %s511, 32, %s513, [#allocation3]
    $region21: #{attention_lstm_forward.3} parent=1 // pred_fallthru
      _
    // Predicated region
    $region22: #{attention_lstm_forward.3} parent=1 // pred_check
      _
    $region23: #{attention_lstm_forward.3} parent=1 // pred_check_branch
      %517 = sbr.rel (0) target = $region25
    $region24: #{attention_lstm_forward.3} parent=1 // pred_region
      %519 = dma.done [#allocation3], 32
    $region25: #{attention_lstm_forward.3} parent=1 // pred_fallthru
      _
    %520 = vsyncpa [#allocation3], 1

// kernel: attention_lstm_forward.2
$region0: #{attention_lstm_forward.2}
  #allocation0 [shape = 'u32[]', space=smem, size = 0x4, offset = 0x4, fixed_abs, tag = 'smem constant byte address 0x4 - core index']
  #allocation1 [shape = 'u32[72,128]{1,0:T(1,128)}', space=vmem, size = 0x9000, scoped, tag = 'internal scratch']
  %s0 = inlined_call_operand.vmem [shape: f32[8,2,128], index: 0, kind: input, shape index: {}]
  %s1 = inlined_call_operand.vmem [shape: f32[32,128], index: 1, kind: input, shape index: {}]
  %s2 = inlined_call_operand.vmem [shape: f32[8,2,32], index: 2, kind: output, shape index: {}]
  %s3 = sld [smem:[#allocation0]]
  $region18: #{attention_lstm_forward.2} parent=0
    _
  %s5 = ssub.s32 1, %s3
  %s6 = scalar_select 0, %s5, %s3
  // Predicated region
  $region2: #{attention_lstm_forward.2} parent=0 // pred_check
    _
  $region3: #{attention_lstm_forward.2} parent=0 // pred_check_branch
    %8 = sbr.rel (0) target = $region5
  $region4: #{attention_lstm_forward.2} parent=0 // pred_region
    _
  $region5: #{attention_lstm_forward.2} parent=0 // pred_fallthru
    _
  // Predicated region
  $region6: #{attention_lstm_forward.2} parent=0 // pred_check
    _
  $region7: #{attention_lstm_forward.2} parent=0 // pred_check_branch
    %10 = sbr.rel (0) target = $region9
  $region8: #{attention_lstm_forward.2} parent=0 // pred_region
    _
  $region9: #{attention_lstm_forward.2} parent=0 // pred_fallthru
    _
  %v11 = vld [vmem:[%s1] sm:$0xff]
  %v12 = vld [vmem:[%s1 + $0x8] sm:$0xff]
  %v13 = vld [vmem:[%s1 + $0x10] sm:$0xff]
  %v14 = vld [vmem:[%s1 + $0x18] sm:$0xff]
  %v15 = vld [vmem:[%s0] sm:$0x3]
  %vm16 = vcmask 261120
  %v18 = vsel %vm16, 0.0, 0
  %20 = vmatpush.msra.mxu0 0.0
  %21 = vmatpush.msra.mxu0 0.0
  %22 = vmatpush.msra.mxu0 0.0
  %23 = vmatpush.msra.mxu0 0.0
  %24 = vmatpush.msra.mxu0 0.0
  %25 = vmatpush.msra.mxu0 0.0
  %26 = vmatpush.msra.mxu0 0.0
  %27 = vmatpush.msra.mxu0 0.0
  %28 = vmatpush.msra.mxu0 0.0
  %29 = vmatpush.msra.mxu0 0.0
  %30 = vmatpush.msra.mxu0 0.0
  %31 = vmatpush.msra.mxu0 0.0
  %v32 = vand.u32 %v14, 4294901760
  %33 = vmatpush.msra.mxu0 %v32
  %v34 = vand.u32 %v13, 4294901760
  %35 = vmatpush.msra.mxu0 %v34
  %v36 = vand.u32 %v12, 4294901760
  %37 = vmatpush.msra.mxu0 %v36
  %v38 = vand.u32 %v11, 4294901760
  %39 = vmatpush.msra.mxu0 %v38
  %v40 = vand.u32 %v18, 4294901760
  %v41 = vsub.f32 %v18, %v40
  %v42 = vand.u32 %v41, 4294901760
  %v43 = vsub.f32 %v41, %v42
  %v44 = vand.u32 %v43, 4294901760
  %45 = vmatmul.f32.gmra.mxu0 %v44
  %v46 = vpop.f32.mrf.mxu0
  %v47 = vadd.f32 0.0, %v46
  %48 = vdwg.mxu0
  %49 = vmatpush.msra.mxu0 0.0
  %50 = vmatpush.msra.mxu0 0.0
  %51 = vmatpush.msra.mxu0 0.0
  %52 = vmatpush.msra.mxu0 0.0
  %53 = vmatpush.msra.mxu0 0.0
  %54 = vmatpush.msra.mxu0 0.0
  %55 = vmatpush.msra.mxu0 0.0
  %56 = vmatpush.msra.mxu0 0.0
  %57 = vmatpush.msra.mxu0 0.0
  %58 = vmatpush.msra.mxu0 0.0
  %59 = vmatpush.msra.mxu0 0.0
  %60 = vmatpush.msra.mxu0 0.0
  %v61 = vand.u32 %v14, 4294901760
  %v62 = vsub.f32 %v14, %v61
  %v63 = vand.u32 %v62, 4294901760
  %v64 = vsub.f32 %v62, %v63
  %v65 = vand.u32 %v64, 4294901760
  %66 = vmatpush.msra.mxu0 %v65
  %v67 = vand.u32 %v13, 4294901760
  %v68 = vsub.f32 %v13, %v67
  %v69 = vand.u32 %v68, 4294901760
  %v70 = vsub.f32 %v68, %v69
  %v71 = vand.u32 %v70, 4294901760
  %72 = vmatpush.msra.mxu0 %v71
  %v73 = vand.u32 %v12, 4294901760
  %v74 = vsub.f32 %v12, %v73
  %v75 = vand.u32 %v74, 4294901760
  %v76 = vsub.f32 %v74, %v75
  %v77 = vand.u32 %v76, 4294901760
  %78 = vmatpush.msra.mxu0 %v77
  %v79 = vand.u32 %v11, 4294901760
  %v80 = vsub.f32 %v11, %v79
  %v81 = vand.u32 %v80, 4294901760
  %v82 = vsub.f32 %v80, %v81
  %v83 = vand.u32 %v82, 4294901760
  %84 = vmatpush.msra.mxu0 %v83
  %v85 = vand.u32 %v18, 4294901760
  %86 = vmatmul.f32.gmra.mxu0 %v85
  %v87 = vpop.f32.mrf.mxu0
  %v88 = vadd.f32 %v47, %v87
  %89 = vdwg.mxu0
  %90 = vmatpush.msra.mxu0 0.0
  %91 = vmatpush.msra.mxu0 0.0
  %92 = vmatpush.msra.mxu0 0.0
  %93 = vmatpush.msra.mxu0 0.0
  %94 = vmatpush.msra.mxu0 0.0
  %95 = vmatpush.msra.mxu0 0.0
  %96 = vmatpush.msra.mxu0 0.0
  %97 = vmatpush.msra.mxu0 0.0
  %98 = vmatpush.msra.mxu0 0.0
  %99 = vmatpush.msra.mxu0 0.0
  %100 = vmatpush.msra.mxu0 0.0
  %101 = vmatpush.msra.mxu0 0.0
  %v102 = vand.u32 %v14, 4294901760
  %v103 = vsub.f32 %v14, %v102
  %104 = vmatpush.msra.mxu0 %v103
  %v105 = vand.u32 %v13, 4294901760
  %v106 = vsub.f32 %v13, %v105
  %107 = vmatpush.msra.mxu0 %v106
  %v108 = vand.u32 %v12, 4294901760
  %v109 = vsub.f32 %v12, %v108
  %110 = vmatpush.msra.mxu0 %v109
  %v111 = vand.u32 %v11, 4294901760
  %v112 = vsub.f32 %v11, %v111
  %113 = vmatpush.msra.mxu0 %v112
  %v114 = vand.u32 %v18, 4294901760
  %v115 = vsub.f32 %v18, %v114
  %116 = vmatmul.f32.gmra.mxu0 %v115
  %v117 = vpop.f32.mrf.mxu0
  %v118 = vadd.f32 %v88, %v117
  %119 = vdwg.mxu0
  %120 = vmatpush.msra.mxu0 0.0
  %121 = vmatpush.msra.mxu0 0.0
  %122 = vmatpush.msra.mxu0 0.0
  %123 = vmatpush.msra.mxu0 0.0
  %124 = vmatpush.msra.mxu0 0.0
  %125 = vmatpush.msra.mxu0 0.0
  %126 = vmatpush.msra.mxu0 0.0
  %127 = vmatpush.msra.mxu0 0.0
  %128 = vmatpush.msra.mxu0 0.0
  %129 = vmatpush.msra.mxu0 0.0
  %130 = vmatpush.msra.mxu0 0.0
  %131 = vmatpush.msra.mxu0 0.0
  %v132 = vand.u32 %v14, 4294901760
  %133 = vmatpush.msra.mxu0 %v132
  %v134 = vand.u32 %v13, 4294901760
  %135 = vmatpush.msra.mxu0 %v134
  %v136 = vand.u32 %v12, 4294901760
  %137 = vmatpush.msra.mxu0 %v136
  %v138 = vand.u32 %v11, 4294901760
  %139 = vmatpush.msra.mxu0 %v138
  %v140 = vand.u32 %v18, 4294901760
  %v141 = vsub.f32 %v18, %v140
  %v142 = vand.u32 %v141, 4294901760
  %143 = vmatmul.f32.gmra.mxu0 %v142
  %v144 = vpop.f32.mrf.mxu0
  %v145 = vadd.f32 %v118, %v144
  %146 = vdwg.mxu0
  %147 = vmatpush.msra.mxu0 0.0
  %148 = vmatpush.msra.mxu0 0.0
  %149 = vmatpush.msra.mxu0 0.0
  %150 = vmatpush.msra.mxu0 0.0
  %151 = vmatpush.msra.mxu0 0.0
  %152 = vmatpush.msra.mxu0 0.0
  %153 = vmatpush.msra.mxu0 0.0
  %154 = vmatpush.msra.mxu0 0.0
  %155 = vmatpush.msra.mxu0 0.0
  %156 = vmatpush.msra.mxu0 0.0
  %157 = vmatpush.msra.mxu0 0.0
  %158 = vmatpush.msra.mxu0 0.0
  %v159 = vand.u32 %v14, 4294901760
  %v160 = vsub.f32 %v14, %v159
  %v161 = vand.u32 %v160, 4294901760
  %162 = vmatpush.msra.mxu0 %v161
  %v163 = vand.u32 %v13, 4294901760
  %v164 = vsub.f32 %v13, %v163
  %v165 = vand.u32 %v164, 4294901760
  %166 = vmatpush.msra.mxu0 %v165
  %v167 = vand.u32 %v12, 4294901760
  %v168 = vsub.f32 %v12, %v167
  %v169 = vand.u32 %v168, 4294901760
  %170 = vmatpush.msra.mxu0 %v169
  %v171 = vand.u32 %v11, 4294901760
  %v172 = vsub.f32 %v11, %v171
  %v173 = vand.u32 %v172, 4294901760
  %174 = vmatpush.msra.mxu0 %v173
  %v175 = vand.u32 %v18, 4294901760
  %176 = vmatmul.f32.gmra.mxu0 %v175
  %v177 = vpop.f32.mrf.mxu0
  %v178 = vadd.f32 %v145, %v177
  %179 = vdwg.mxu0
  %180 = vmatpush.msra.mxu0 0.0
  %181 = vmatpush.msra.mxu0 0.0
  %182 = vmatpush.msra.mxu0 0.0
  %183 = vmatpush.msra.mxu0 0.0
  %184 = vmatpush.msra.mxu0 0.0
  %185 = vmatpush.msra.mxu0 0.0
  %186 = vmatpush.msra.mxu0 0.0
  %187 = vmatpush.msra.mxu0 0.0
  %188 = vmatpush.msra.mxu0 0.0
  %189 = vmatpush.msra.mxu0 0.0
  %190 = vmatpush.msra.mxu0 0.0
  %191 = vmatpush.msra.mxu0 0.0
  %v192 = vand.u32 %v14, 4294901760
  %193 = vmatpush.msra.mxu0 %v192
  %v194 = vand.u32 %v13, 4294901760
  %195 = vmatpush.msra.mxu0 %v194
  %v196 = vand.u32 %v12, 4294901760
  %197 = vmatpush.msra.mxu0 %v196
  %v198 = vand.u32 %v11, 4294901760
  %199 = vmatpush.msra.mxu0 %v198
  %v200 = vand.u32 %v18, 4294901760
  %201 = vmatmul.f32.gmra.mxu0 %v200
  %v202 = vpop.f32.mrf.mxu0
  %v203 = vadd.f32 %v178, %v202
  %204 = vdwg.mxu0
  %v205 = vadd.f32 %v15, %v203
  %v206 = vxor.u32 %v205, 2147483648
  %v207 = vmul.f32 %v206, 1.442695
  %v208 = vpow.pop %v207
  %v209 = vadd.f32 %v208, 1.0
  %v210 = vrcp.pop %v209
  %v211 = vmul.f32 %v209, %v210
  %v212 = vsub.f32 1.0, %v211
  %v213 = vmul.f32 %v210, %v212
  %v214 = vadd.f32 %v210, %v213
  %vm215 = vweird.f32 %v209
  %vm216 = vweird.f32 %v210
  %vm217 = vmor %vm215, %vm216
  %v218 = vsel %vm217, %v210, %v214
  %v219 = vand.u32 2147483647, %v209
  %vm220 = vcmp.eq.f32.partialorder %v219, 8.507059e+37
  %v221 = vand.u32 %v209, 2147483648
  %v222 = vor.u32 1.1754944e-38, %v221
  %v223 = vsel %vm220, %v222, %v218
  %v224 = vmul.f32 1.0, %v223
  %v225 = vtanh.pop %v205
  %v226 = vmul.f32 %v224, 0.0
  %228 = vrot.lane.b32.xlu0 %v225, 64
  %v229 = vpop.permute.xlu0 %228
  %v231 = vmul.f32 %v224, %v229
  %233 = vrot.lane.b32.xlu0 %v231, 32
  %v234 = vpop.permute.xlu0 %233
  %v236 = vadd.f32 %v226, %v234
  %v237 = vtanh.pop %v236
  %239 = vrot.lane.b32.xlu0 %v237, 64
  %v240 = vpop.permute.xlu0 %239
  %v242 = vmul.f32 %v224, %v240
  %244 = vrot.lane.b32.xlu0 %v242, 32
  %v245 = vpop.permute.xlu0 %244
  %vm247 = vcmask 254976
  %248 = vst.msk [vmem:[%s2] sm:$0x3] %vm247, %v245
  %s249 = scalar_lea.vmem %s0, 2
  %v250 = vld [vmem:[%s249] sm:$0x3]
  %v251 = vsel %vm16, %v245, 0
  %253 = vmatpush.msra.mxu0 0.0
  %254 = vmatpush.msra.mxu0 0.0
  %255 = vmatpush.msra.mxu0 0.0
  %256 = vmatpush.msra.mxu0 0.0
  %257 = vmatpush.msra.mxu0 0.0
  %258 = vmatpush.msra.mxu0 0.0
  %259 = vmatpush.msra.mxu0 0.0
  %260 = vmatpush.msra.mxu0 0.0
  %261 = vmatpush.msra.mxu0 0.0
  %262 = vmatpush.msra.mxu0 0.0
  %263 = vmatpush.msra.mxu0 0.0
  %264 = vmatpush.msra.mxu0 0.0
  %v265 = vand.u32 %v14, 4294901760
  %266 = vmatpush.msra.mxu0 %v265
  %v267 = vand.u32 %v13, 4294901760
  %268 = vmatpush.msra.mxu0 %v267
  %v269 = vand.u32 %v12, 4294901760
  %270 = vmatpush.msra.mxu0 %v269
  %v271 = vand.u32 %v11, 4294901760
  %272 = vmatpush.msra.mxu0 %v271
  %v273 = vand.u32 %v251, 4294901760
  %v274 = vsub.f32 %v251, %v273
  %v275 = vand.u32 %v274, 4294901760
  %v276 = vsub.f32 %v274, %v275
  %v277 = vand.u32 %v276, 4294901760
  %278 = vmatmul.f32.gmra.mxu0 %v277
  %v279 = vpop.f32.mrf.mxu0
  %v280 = vadd.f32 0.0, %v279
  %281 = vdwg.mxu0
  %282 = vmatpush.msra.mxu0 0.0
  %283 = vmatpush.msra.mxu0 0.0
  %284 = vmatpush.msra.mxu0 0.0
  %285 = vmatpush.msra.mxu0 0.0
  %286 = vmatpush.msra.mxu0 0.0
  %287 = vmatpush.msra.mxu0 0.0
  %288 = vmatpush.msra.mxu0 0.0
  %289 = vmatpush.msra.mxu0 0.0
  %290 = vmatpush.msra.mxu0 0.0
  %291 = vmatpush.msra.mxu0 0.0
  %292 = vmatpush.msra.mxu0 0.0
  %293 = vmatpush.msra.mxu0 0.0
  %v294 = vand.u32 %v14, 4294901760
  %v295 = vsub.f32 %v14, %v294
  %v296 = vand.u32 %v295, 4294901760
  %v297 = vsub.f32 %v295, %v296
  %v298 = vand.u32 %v297, 4294901760
  %299 = vmatpush.msra.mxu0 %v298
  %v300 = vand.u32 %v13, 4294901760
  %v301 = vsub.f32 %v13, %v300
  %v302 = vand.u32 %v301, 4294901760
  %v303 = vsub.f32 %v301, %v302
  %v304 = vand.u32 %v303, 4294901760
  %305 = vmatpush.msra.mxu0 %v304
  %v306 = vand.u32 %v12, 4294901760
  %v307 = vsub.f32 %v12, %v306
  %v308 = vand.u32 %v307, 4294901760
  %v309 = vsub.f32 %v307, %v308
  %v310 = vand.u32 %v309, 4294901760
  %311 = vmatpush.msra.mxu0 %v310
  %v312 = vand.u32 %v11, 4294901760
  %v313 = vsub.f32 %v11, %v312
  %v314 = vand.u32 %v313, 4294901760
  %v315 = vsub.f32 %v313, %v314
  %v316 = vand.u32 %v315, 4294901760
  %317 = vmatpush.msra.mxu0 %v316
  %v318 = vand.u32 %v251, 4294901760
  %319 = vmatmul.f32.gmra.mxu0 %v318
  %v320 = vpop.f32.mrf.mxu0
  %v321 = vadd.f32 %v280, %v320
  %322 = vdwg.mxu0
  %323 = vmatpush.msra.mxu0 0.0
  %324 = vmatpush.msra.mxu0 0.0
  %325 = vmatpush.msra.mxu0 0.0
  %326 = vmatpush.msra.mxu0 0.0
  %327 = vmatpush.msra.mxu0 0.0
  %328 = vmatpush.msra.mxu0 0.0
  %329 = vmatpush.msra.mxu0 0.0
  %330 = vmatpush.msra.mxu0 0.0
  %331 = vmatpush.msra.mxu0 0.0
  %332 = vmatpush.msra.mxu0 0.0
  %333 = vmatpush.msra.mxu0 0.0
  %334 = vmatpush.msra.mxu0 0.0
  %v335 = vand.u32 %v14, 4294901760
  %v336 = vsub.f32 %v14, %v335
  %337 = vmatpush.msra.mxu0 %v336
  %v338 = vand.u32 %v13, 4294901760
  %v339 = vsub.f32 %v13, %v338
  %340 = vmatpush.msra.mxu0 %v339
  %v341 = vand.u32 %v12, 4294901760
  %v342 = vsub.f32 %v12, %v341
  %343 = vmatpush.msra.mxu0 %v342
  %v344 = vand.u32 %v11, 4294901760
  %v345 = vsub.f32 %v11, %v344
  %346 = vmatpush.msra.mxu0 %v345
  %v347 = vand.u32 %v251, 4294901760
  %v348 = vsub.f32 %v251, %v347
  %349 = vmatmul.f32.gmra.mxu0 %v348
  %v350 = vpop.f32.mrf.mxu0
  %v351 = vadd.f32 %v321, %v350
  %352 = vdwg.mxu0
  %353 = vmatpush.msra.mxu0 0.0
  %354 = vmatpush.msra.mxu0 0.0
  %355 = vmatpush.msra.mxu0 0.0
  %356 = vmatpush.msra.mxu0 0.0
  %357 = vmatpush.msra.mxu0 0.0
  %358 = vmatpush.msra.mxu0 0.0
  %359 = vmatpush.msra.mxu0 0.0
  %360 = vmatpush.msra.mxu0 0.0
  %361 = vmatpush.msra.mxu0 0.0
  %362 = vmatpush.msra.mxu0 0.0
  %363 = vmatpush.msra.mxu0 0.0
  %364 = vmatpush.msra.mxu0 0.0
  %v365 = vand.u32 %v14, 4294901760
  %366 = vmatpush.msra.mxu0 %v365
  %v367 = vand.u32 %v13, 4294901760
  %368 = vmatpush.msra.mxu0 %v367
  %v369 = vand.u32 %v12, 4294901760
  %370 = vmatpush.msra.mxu0 %v369
  %v371 = vand.u32 %v11, 4294901760
  %372 = vmatpush.msra.mxu0 %v371
  %v373 = vand.u32 %v251, 4294901760
  %v374 = vsub.f32 %v251, %v373
  %v375 = vand.u32 %v374, 4294901760
  %376 = vmatmul.f32.gmra.mxu0 %v375
  %v377 = vpop.f32.mrf.mxu0
  %v378 = vadd.f32 %v351, %v377
  %379 = vdwg.mxu0
  %380 = vmatpush.msra.mxu0 0.0
  %381 = vmatpush.msra.mxu0 0.0
  %382 = vmatpush.msra.mxu0 0.0
  %383 = vmatpush.msra.mxu0 0.0
  %384 = vmatpush.msra.mxu0 0.0
  %385 = vmatpush.msra.mxu0 0.0
  %386 = vmatpush.msra.mxu0 0.0
  %387 = vmatpush.msra.mxu0 0.0
  %388 = vmatpush.msra.mxu0 0.0
  %389 = vmatpush.msra.mxu0 0.0
  %390 = vmatpush.msra.mxu0 0.0
  %391 = vmatpush.msra.mxu0 0.0
  %v392 = vand.u32 %v14, 4294901760
  %v393 = vsub.f32 %v14, %v392
  %v394 = vand.u32 %v393, 4294901760
  %395 = vmatpush.msra.mxu0 %v394
  %v396 = vand.u32 %v13, 4294901760
  %v397 = vsub.f32 %v13, %v396
  %v398 = vand.u32 %v397, 4294901760
  %399 = vmatpush.msra.mxu0 %v398
  %v400 = vand.u32 %v12, 4294901760
  %v401 = vsub.f32 %v12, %v400
  %v402 = vand.u32 %v401, 4294901760
  %403 = vmatpush.msra.mxu0 %v402
  %v404 = vand.u32 %v11, 4294901760
  %v405 = vsub.f32 %v11, %v404
  %v406 = vand.u32 %v405, 4294901760
  %407 = vmatpush.msra.mxu0 %v406
  %v408 = vand.u32 %v251, 4294901760
  %409 = vmatmul.f32.gmra.mxu0 %v408
  %v410 = vpop.f32.mrf.mxu0
  %v411 = vadd.f32 %v378, %v410
  %412 = vdwg.mxu0
  %413 = vmatpush.msra.mxu0 0.0
  %414 = vmatpush.msra.mxu0 0.0
  %415 = vmatpush.msra.mxu0 0.0
  %416 = vmatpush.msra.mxu0 0.0
  %417 = vmatpush.msra.mxu0 0.0
  %418 = vmatpush.msra.mxu0 0.0
  %419 = vmatpush.msra.mxu0 0.0
  %420 = vmatpush.msra.mxu0 0.0
  %421 = vmatpush.msra.mxu0 0.0
  %422 = vmatpush.msra.mxu0 0.0
  %423 = vmatpush.msra.mxu0 0.0
  %424 = vmatpush.msra.mxu0 0.0
  %v425 = vand.u32 %v14, 4294901760
  %426 = vmatpush.msra.mxu0 %v425
  %v427 = vand.u32 %v13, 4294901760
  %428 = vmatpush.msra.mxu0 %v427
  %v429 = vand.u32 %v12, 4294901760
  %430 = vmatpush.msra.mxu0 %v429
  %v431 = vand.u32 %v11, 4294901760
  %432 = vmatpush.msra.mxu0 %v431
  %v433 = vand.u32 %v251, 4294901760
  %434 = vmatmul.f32.gmra.mxu0 %v433
  %v435 = vpop.f32.mrf.mxu0
  %v436 = vadd.f32 %v411, %v435
  %437 = vdwg.mxu0
  %v438 = vadd.f32 %v250, %v436
  %v439 = vxor.u32 %v438, 2147483648
  %v440 = vmul.f32 %v439, 1.442695
  %v441 = vpow.pop %v440
  %v442 = vadd.f32 %v441, 1.0
  %v443 = vrcp.pop %v442
  %v444 = vmul.f32 %v442, %v443
  %v445 = vsub.f32 1.0, %v444
  %v446 = vmul.f32 %v443, %v445
  %v447 = vadd.f32 %v443, %v446
  %vm448 = vweird.f32 %v442
  %vm449 = vweird.f32 %v443
  %vm450 = vmor %vm448, %vm449
  %v451 = vsel %vm450, %v443, %v447
  %v452 = vand.u32 2147483647, %v442
  %vm453 = vcmp.eq.f32.partialorder %v452, 8.507059e+37
  %v454 = vand.u32 %v442, 2147483648
  %v455 = vor.u32 1.1754944e-38, %v454
  %v456 = vsel %vm453, %v455, %v451
  %v457 = vmul.f32 1.0, %v456
  %v458 = vtanh.pop %v438
  %v459 = vmul.f32 %v457, %v236
  %461 = vrot.lane.b32.xlu0 %v458, 64
  %v462 = vpop.permute.xlu0 %461
  %v464 = vmul.f32 %v457, %v462
  %466 = vrot.lane.b32.xlu0 %v464, 32
  %v467 = vpop.permute.xlu0 %466
  %v469 = vadd.f32 %v459, %v467
  %v470 = vtanh.pop %v469
  %472 = vrot.lane.b32.xlu0 %v470, 64
  %v473 = vpop.permute.xlu0 %472
  %v475 = vmul.f32 %v457, %v473
  %477 = vrot.lane.b32.xlu0 %v475, 32
  %v478 = vpop.permute.xlu0 %477
  %s480 = scalar_lea.vmem %s2, 2
  %481 = vst.msk [vmem:[%s480] sm:$0x3] %vm247, %v478
  %s482 = scalar_lea.vmem %s0, 4
  %v483 = vld [vmem:[%s482] sm:$0x3]
  %v484 = vsel %vm16, %v478, 0
  %486 = vmatpush.msra.mxu0 0.0
  %487 = vmatpush.msra.mxu0 0.0
  %488 = vmatpush.msra.mxu0 0.0
  %489 = vmatpush.msra.mxu0 0.0
  %490 = vmatpush.msra.mxu0 0.0
  %491 = vmatpush.msra.mxu0 0.0
  %492 = vmatpush.msra.mxu0 0.0
  %493 = vmatpush.msra.mxu0 0.0
  %494 = vmatpush.msra.mxu0 0.0
  %495 = vmatpush.msra.mxu0 0.0
  %496 = vmatpush.msra.mxu0 0.0
  %497 = vmatpush.msra.mxu0 0.0
  %v498 = vand.u32 %v14, 4294901760
  %499 = vmatpush.msra.mxu0 %v498
  %v500 = vand.u32 %v13, 4294901760
  %501 = vmatpush.msra.mxu0 %v500
  %v502 = vand.u32 %v12, 4294901760
  %503 = vmatpush.msra.mxu0 %v502
  %v504 = vand.u32 %v11, 4294901760
  %505 = vmatpush.msra.mxu0 %v504
  %v506 = vand.u32 %v484, 4294901760
  %v507 = vsub.f32 %v484, %v506
  %v508 = vand.u32 %v507, 4294901760
  %v509 = vsub.f32 %v507, %v508
  %v510 = vand.u32 %v509, 4294901760
  %511 = vmatmul.f32.gmra.mxu0 %v510
  %v512 = vpop.f32.mrf.mxu0
  %v513 = vadd.f32 0.0, %v512
  %514 = vdwg.mxu0
  %515 = vmatpush.msra.mxu0 0.0
  %516 = vmatpush.msra.mxu0 0.0
  %517 = vmatpush.msra.mxu0 0.0
  %518 = vmatpush.msra.mxu0 0.0
  %519 = vmatpush.msra.mxu0 0.0
  %520 = vmatpush.msra.mxu0 0.0
  %521 = vmatpush.msra.mxu0 0.0
  %522 = vmatpush.msra.mxu0 0.0
  %523 = vmatpush.msra.mxu0 0.0
  %524 = vmatpush.msra.mxu0 0.0
  %525 = vmatpush.msra.mxu0 0.0
  %526 = vmatpush.msra.mxu0 0.0
  %v527 = vand.u32 %v14, 4294901760
  %v528 = vsub.f32 %v14, %v527
  %v529 = vand.u32 %v528, 4294901760
  %v530 = vsub.f32 %v528, %v529
  %v531 = vand.u32 %v530, 4294901760
  %532 = vmatpush.msra.mxu0 %v531
  %v533 = vand.u32 %v13, 4294901760
  %v534 = vsub.f32 %v13, %v533
  %v535 = vand.u32 %v534, 4294901760
  %v536 = vsub.f32 %v534, %v535
  %v537 = vand.u32 %v536, 4294901760
  %538 = vmatpush.msra.mxu0 %v537
  %v539 = vand.u32 %v12, 4294901760
  %v540 = vsub.f32 %v12, %v539
  %v541 = vand.u32 %v540, 4294901760
  %v542 = vsub.f32 %v540, %v541
  %v543 = vand.u32 %v542, 4294901760
  %544 = vmatpush.msra.mxu0 %v543
  %v545 = vand.u32 %v11, 4294901760
  %v546 = vsub.f32 %v11, %v545
  %v547 = vand.u32 %v546, 4294901760
  %v548 = vsub.f32 %v546, %v547
  %v549 = vand.u32 %v548, 4294901760
  %550 = vmatpush.msra.mxu0 %v549
  %v551 = vand.u32 %v484, 4294901760
  %552 = vmatmul.f32.gmra.mxu0 %v551
  %v553 = vpop.f32.mrf.mxu0
  %v554 = vadd.f32 %v513, %v553
  %555 = vdwg.mxu0
  %556 = vmatpush.msra.mxu0 0.0
  %557 = vmatpush.msra.mxu0 0.0
  %558 = vmatpush.msra.mxu0 0.0
  %559 = vmatpush.msra.mxu0 0.0
  %560 = vmatpush.msra.mxu0 0.0
  %561 = vmatpush.msra.mxu0 0.0
  %562 = vmatpush.msra.mxu0 0.0
  %563 = vmatpush.msra.mxu0 0.0
  %564 = vmatpush.msra.mxu0 0.0
  %565 = vmatpush.msra.mxu0 0.0
  %566 = vmatpush.msra.mxu0 0.0
  %567 = vmatpush.msra.mxu0 0.0
  %v568 = vand.u32 %v14, 4294901760
  %v569 = vsub.f32 %v14, %v568
  %570 = vmatpush.msra.mxu0 %v569
  %v571 = vand.u32 %v13, 4294901760
  %v572 = vsub.f32 %v13, %v571
  %573 = vmatpush.msra.mxu0 %v572
  %v574 = vand.u32 %v12, 4294901760
  %v575 = vsub.f32 %v12, %v574
  %576 = vmatpush.msra.mxu0 %v575
  %v577 = vand.u32 %v11, 4294901760
  %v578 = vsub.f32 %v11, %v577
  %579 = vmatpush.msra.mxu0 %v578
  %v580 = vand.u32 %v484, 4294901760
  %v581 = vsub.f32 %v484, %v580
  %582 = vmatmul.f32.gmra.mxu0 %v581
  %v583 = vpop.f32.mrf.mxu0
  %v584 = vadd.f32 %v554, %v583
  %585 = vdwg.mxu0
  %586 = vmatpush.msra.mxu0 0.0
  %587 = vmatpush.msra.mxu0 0.0
  %588 = vmatpush.msra.mxu0 0.0
  %589 = vmatpush.msra.mxu0 0.0
  %590 = vmatpush.msra.mxu0 0.0
  %591 = vmatpush.msra.mxu0 0.0
  %592 = vmatpush.msra.mxu0 0.0
  %593 = vmatpush.msra.mxu0 0.0
  %594 = vmatpush.msra.mxu0 0.0
  %595 = vmatpush.msra.mxu0 0.0
  %596 = vmatpush.msra.mxu0 0.0
  %597 = vmatpush.msra.mxu0 0.0
  %v598 = vand.u32 %v14, 4294901760
  %599 = vmatpush.msra.mxu0 %v598
  %v600 = vand.u32 %v13, 4294901760
  %601 = vmatpush.msra.mxu0 %v600
  %v602 = vand.u32 %v12, 4294901760
  %603 = vmatpush.msra.mxu0 %v602
  %v604 = vand.u32 %v11, 4294901760
  %605 = vmatpush.msra.mxu0 %v604
  %v606 = vand.u32 %v484, 4294901760
  %v607 = vsub.f32 %v484, %v606
  %v608 = vand.u32 %v607, 4294901760
  %609 = vmatmul.f32.gmra.mxu0 %v608
  %v610 = vpop.f32.mrf.mxu0
  %v611 = vadd.f32 %v584, %v610
  %612 = vdwg.mxu0
  %613 = vmatpush.msra.mxu0 0.0
  %614 = vmatpush.msra.mxu0 0.0
  %615 = vmatpush.msra.mxu0 0.0
  %616 = vmatpush.msra.mxu0 0.0
  %617 = vmatpush.msra.mxu0 0.0
  %618 = vmatpush.msra.mxu0 0.0
  %619 = vmatpush.msra.mxu0 0.0
  %620 = vmatpush.msra.mxu0 0.0
  %621 = vmatpush.msra.mxu0 0.0
  %622 = vmatpush.msra.mxu0 0.0
  %623 = vmatpush.msra.mxu0 0.0
  %624 = vmatpush.msra.mxu0 0.0
  %v625 = vand.u32 %v14, 4294901760
  %v626 = vsub.f32 %v14, %v625
  %v627 = vand.u32 %v626, 4294901760
  %628 = vmatpush.msra.mxu0 %v627
  %v629 = vand.u32 %v13, 4294901760
  %v630 = vsub.f32 %v13, %v629
  %v631 = vand.u32 %v630, 4294901760
  %632 = vmatpush.msra.mxu0 %v631
  %v633 = vand.u32 %v12, 4294901760
  %v634 = vsub.f32 %v12, %v633
  %v635 = vand.u32 %v634, 4294901760
  %636 = vmatpush.msra.mxu0 %v635
  %v637 = vand.u32 %v11, 4294901760
  %v638 = vsub.f32 %v11, %v637
  %v639 = vand.u32 %v638, 4294901760
  %640 = vmatpush.msra.mxu0 %v639
  %v641 = vand.u32 %v484, 4294901760
  %642 = vmatmul.f32.gmra.mxu0 %v641
  %v643 = vpop.f32.mrf.mxu0
  %v644 = vadd.f32 %v611, %v643
  %645 = vdwg.mxu0
  %646 = vmatpush.msra.mxu0 0.0
  %647 = vmatpush.msra.mxu0 0.0
  %648 = vmatpush.msra.mxu0 0.0
  %649 = vmatpush.msra.mxu0 0.0
  %650 = vmatpush.msra.mxu0 0.0
  %651 = vmatpush.msra.mxu0 0.0
  %652 = vmatpush.msra.mxu0 0.0
  %653 = vmatpush.msra.mxu0 0.0
  %654 = vmatpush.msra.mxu0 0.0
  %655 = vmatpush.msra.mxu0 0.0
  %656 = vmatpush.msra.mxu0 0.0
  %657 = vmatpush.msra.mxu0 0.0
  %v658 = vand.u32 %v14, 4294901760
  %659 = vmatpush.msra.mxu0 %v658
  %v660 = vand.u32 %v13, 4294901760
  %661 = vmatpush.msra.mxu0 %v660
  %v662 = vand.u32 %v12, 4294901760
  %663 = vmatpush.msra.mxu0 %v662
  %v664 = vand.u32 %v11, 4294901760
  %665 = vmatpush.msra.mxu0 %v664
  %v666 = vand.u32 %v484, 4294901760
  %667 = vmatmul.f32.gmra.mxu0 %v666
  %v668 = vpop.f32.mrf.mxu0
  %v669 = vadd.f32 %v644, %v668
  %670 = vdwg.mxu0
  %v671 = vadd.f32 %v483, %v669
  %v672 = vxor.u32 %v671, 2147483648
  %v673 = vmul.f32 %v672, 1.442695
  %v674 = vpow.pop %v673
  %v675 = vadd.f32 %v674, 1.0
  %v676 = vrcp.pop %v675
  %v677 = vmul.f32 %v675, %v676
  %v678 = vsub.f32 1.0, %v677
  %v679 = vmul.f32 %v676, %v678
  %v680 = vadd.f32 %v676, %v679
  %vm681 = vweird.f32 %v675
  %vm682 = vweird.f32 %v676
  %vm683 = vmor %vm681, %vm682
  %v684 = vsel %vm683, %v676, %v680
  %v685 = vand.u32 2147483647, %v675
  %vm686 = vcmp.eq.f32.partialorder %v685, 8.507059e+37
  %v687 = vand.u32 %v675, 2147483648
  %v688 = vor.u32 1.1754944e-38, %v687
  %v689 = vsel %vm686, %v688, %v684
  %v690 = vmul.f32 1.0, %v689
  %v691 = vtanh.pop %v671
  %v692 = vmul.f32 %v690, %v469
  %694 = vrot.lane.b32.xlu0 %v691, 64
  %v695 = vpop.permute.xlu0 %694
  %v697 = vmul.f32 %v690, %v695
  %699 = vrot.lane.b32.xlu0 %v697, 32
  %v700 = vpop.permute.xlu0 %699
  %v702 = vadd.f32 %v692, %v700
  %v703 = vtanh.pop %v702
  %705 = vrot.lane.b32.xlu0 %v703, 64
  %v706 = vpop.permute.xlu0 %705
  %v708 = vmul.f32 %v690, %v706
  %710 = vrot.lane.b32.xlu0 %v708, 32
  %v711 = vpop.permute.xlu0 %710
  %s713 = scalar_lea.vmem %s2, 4
  %714 = vst.msk [vmem:[%s713] sm:$0x3] %vm247, %v711
  %s715 = scalar_lea.vmem %s0, 6
  %v716 = vld [vmem:[%s715] sm:$0x3]
  %v717 = vsel %vm16, %v711, 0
  %719 = vmatpush.msra.mxu0 0.0
  %720 = vmatpush.msra.mxu0 0.0
  %721 = vmatpush.msra.mxu0 0.0
  %722 = vmatpush.msra.mxu0 0.0
  %723 = vmatpush.msra.mxu0 0.0
  %724 = vmatpush.msra.mxu0 0.0
  %725 = vmatpush.msra.mxu0 0.0
  %726 = vmatpush.msra.mxu0 0.0
  %727 = vmatpush.msra.mxu0 0.0
  %728 = vmatpush.msra.mxu0 0.0
  %729 = vmatpush.msra.mxu0 0.0
  %730 = vmatpush.msra.mxu0 0.0
  %v731 = vand.u32 %v14, 4294901760
  %732 = vmatpush.msra.mxu0 %v731
  %v733 = vand.u32 %v13, 4294901760
  %734 = vmatpush.msra.mxu0 %v733
  %v735 = vand.u32 %v12, 4294901760
  %736 = vmatpush.msra.mxu0 %v735
  %v737 = vand.u32 %v11, 4294901760
  %738 = vmatpush.msra.mxu0 %v737
  %v739 = vand.u32 %v717, 4294901760
  %v740 = vsub.f32 %v717, %v739
  %v741 = vand.u32 %v740, 4294901760
  %v742 = vsub.f32 %v740, %v741
  %v743 = vand.u32 %v742, 4294901760
  %744 = vmatmul.f32.gmra.mxu0 %v743
  %v745 = vpop.f32.mrf.mxu0
  %v746 = vadd.f32 0.0, %v745
  %747 = vdwg.mxu0
  %748 = vmatpush.msra.mxu0 0.0
  %749 = vmatpush.msra.mxu0 0.0
  %750 = vmatpush.msra.mxu0 0.0
  %751 = vmatpush.msra.mxu0 0.0
  %752 = vmatpush.msra.mxu0 0.0
  %753 = vmatpush.msra.mxu0 0.0
  %754 = vmatpush.msra.mxu0 0.0
  %755 = vmatpush.msra.mxu0 0.0
  %756 = vmatpush.msra.mxu0 0.0
  %757 = vmatpush.msra.mxu0 0.0
  %758 = vmatpush.msra.mxu0 0.0
  %759 = vmatpush.msra.mxu0 0.0
  %v760 = vand.u32 %v14, 4294901760
  %v761 = vsub.f32 %v14, %v760
  %v762 = vand.u32 %v761, 4294901760
  %v763 = vsub.f32 %v761, %v762
  %v764 = vand.u32 %v763, 4294901760
  %765 = vmatpush.msra.mxu0 %v764
  %v766 = vand.u32 %v13, 4294901760
  %v767 = vsub.f32 %v13, %v766
  %v768 = vand.u32 %v767, 4294901760
  %v769 = vsub.f32 %v767, %v768
  %v770 = vand.u32 %v769, 4294901760
  %771 = vmatpush.msra.mxu0 %v770
  %v772 = vand.u32 %v12, 4294901760
  %v773 = vsub.f32 %v12, %v772
  %v774 = vand.u32 %v773, 4294901760
  %v775 = vsub.f32 %v773, %v774
  %v776 = vand.u32 %v775, 4294901760
  %777 = vmatpush.msra.mxu0 %v776
  %v778 = vand.u32 %v11, 4294901760
  %v779 = vsub.f32 %v11, %v778
  %v780 = vand.u32 %v779, 4294901760
  %v781 = vsub.f32 %v779, %v780
  %v782 = vand.u32 %v781, 4294901760
  %783 = vmatpush.msra.mxu0 %v782
  %v784 = vand.u32 %v717, 4294901760
  %785 = vmatmul.f32.gmra.mxu0 %v784
  %v786 = vpop.f32.mrf.mxu0
  %v787 = vadd.f32 %v746, %v786
  %788 = vdwg.mxu0
  %789 = vmatpush.msra.mxu0 0.0
  %790 = vmatpush.msra.mxu0 0.0
  %791 = vmatpush.msra.mxu0 0.0
  %792 = vmatpush.msra.mxu0 0.0
  %793 = vmatpush.msra.mxu0 0.0
  %794 = vmatpush.msra.mxu0 0.0
  %795 = vmatpush.msra.mxu0 0.0
  %796 = vmatpush.msra.mxu0 0.0
  %797 = vmatpush.msra.mxu0 0.0
  %798 = vmatpush.msra.mxu0 0.0
  %799 = vmatpush.msra.mxu0 0.0
  %800 = vmatpush.msra.mxu0 0.0
  %v801 = vand.u32 %v14, 4294901760
  %v802 = vsub.f32 %v14, %v801
  %803 = vmatpush.msra.mxu0 %v802
  %v804 = vand.u32 %v13, 4294901760
  %v805 = vsub.f32 %v13, %v804
  %806 = vmatpush.msra.mxu0 %v805
  %v807 = vand.u32 %v12, 4294901760
  %v808 = vsub.f32 %v12, %v807
  %809 = vmatpush.msra.mxu0 %v808
  %v810 = vand.u32 %v11, 4294901760
  %v811 = vsub.f32 %v11, %v810
  %812 = vmatpush.msra.mxu0 %v811
  %v813 = vand.u32 %v717, 4294901760
  %v814 = vsub.f32 %v717, %v813
  %815 = vmatmul.f32.gmra.mxu0 %v814
  %v816 = vpop.f32.mrf.mxu0
  %v817 = vadd.f32 %v787, %v816
  %818 = vdwg.mxu0
  %819 = vmatpush.msra.mxu0 0.0
  %820 = vmatpush.msra.mxu0 0.0
  %821 = vmatpush.msra.mxu0 0.0
  %822 = vmatpush.msra.mxu0 0.0
  %823 = vmatpush.msra.mxu0 0.0
  %824 = vmatpush.msra.mxu0 0.0
  %825 = vmatpush.msra.mxu0 0.0
  %826 = vmatpush.msra.mxu0 0.0
  %827 = vmatpush.msra.mxu0 0.0
  %828 = vmatpush.msra.mxu0 0.0
  %829 = vmatpush.msra.mxu0 0.0
  %830 = vmatpush.msra.mxu0 0.0
  %v831 = vand.u32 %v14, 4294901760
  %832 = vmatpush.msra.mxu0 %v831
  %v833 = vand.u32 %v13, 4294901760
  %834 = vmatpush.msra.mxu0 %v833
  %v835 = vand.u32 %v12, 4294901760
  %836 = vmatpush.msra.mxu0 %v835
  %v837 = vand.u32 %v11, 4294901760
  %838 = vmatpush.msra.mxu0 %v837
  %v839 = vand.u32 %v717, 4294901760
  %v840 = vsub.f32 %v717, %v839
  %v841 = vand.u32 %v840, 4294901760
  %842 = vmatmul.f32.gmra.mxu0 %v841
  %v843 = vpop.f32.mrf.mxu0
  %v844 = vadd.f32 %v817, %v843
  %845 = vdwg.mxu0
  %846 = vmatpush.msra.mxu0 0.0
  %847 = vmatpush.msra.mxu0 0.0
  %848 = vmatpush.msra.mxu0 0.0
  %849 = vmatpush.msra.mxu0 0.0
  %850 = vmatpush.msra.mxu0 0.0
  %851 = vmatpush.msra.mxu0 0.0
  %852 = vmatpush.msra.mxu0 0.0
  %853 = vmatpush.msra.mxu0 0.0
  %854 = vmatpush.msra.mxu0 0.0
  %855 = vmatpush.msra.mxu0 0.0
  %856 = vmatpush.msra.mxu0 0.0
  %857 = vmatpush.msra.mxu0 0.0
  %v858 = vand.u32 %v14, 4294901760
  %v859 = vsub.f32 %v14, %v858
  %v860 = vand.u32 %v859, 4294901760
  %861 = vmatpush.msra.mxu0 %v860
  %v862 = vand.u32 %v13, 4294901760
  %v863 = vsub.f32 %v13, %v862
  %v864 = vand.u32 %v863, 4294901760
  %865 = vmatpush.msra.mxu0 %v864
  %v866 = vand.u32 %v12, 4294901760
  %v867 = vsub.f32 %v12, %v866
  %v868 = vand.u32 %v867, 4294901760
  %869 = vmatpush.msra.mxu0 %v868
  %v870 = vand.u32 %v11, 4294901760
  %v871 = vsub.f32 %v11, %v870
  %v872 = vand.u32 %v871, 4294901760
  %873 = vmatpush.msra.mxu0 %v872
  %v874 = vand.u32 %v717, 4294901760
  %875 = vmatmul.f32.gmra.mxu0 %v874
  %v876 = vpop.f32.mrf.mxu0
  %v877 = vadd.f32 %v844, %v876
  %878 = vdwg.mxu0
  %879 = vmatpush.msra.mxu0 0.0
  %880 = vmatpush.msra.mxu0 0.0
  %881 = vmatpush.msra.mxu0 0.0
  %882 = vmatpush.msra.mxu0 0.0
  %883 = vmatpush.msra.mxu0 0.0
  %884 = vmatpush.msra.mxu0 0.0
  %885 = vmatpush.msra.mxu0 0.0
  %886 = vmatpush.msra.mxu0 0.0
  %887 = vmatpush.msra.mxu0 0.0
  %888 = vmatpush.msra.mxu0 0.0
  %889 = vmatpush.msra.mxu0 0.0
  %890 = vmatpush.msra.mxu0 0.0
  %v891 = vand.u32 %v14, 4294901760
  %892 = vmatpush.msra.mxu0 %v891
  %v893 = vand.u32 %v13, 4294901760
  %894 = vmatpush.msra.mxu0 %v893
  %v895 = vand.u32 %v12, 4294901760
  %896 = vmatpush.msra.mxu0 %v895
  %v897 = vand.u32 %v11, 4294901760
  %898 = vmatpush.msra.mxu0 %v897
  %v899 = vand.u32 %v717, 4294901760
  %900 = vmatmul.f32.gmra.mxu0 %v899
  %v901 = vpop.f32.mrf.mxu0
  %v902 = vadd.f32 %v877, %v901
  %903 = vdwg.mxu0
  %v904 = vadd.f32 %v716, %v902
  %v905 = vxor.u32 %v904, 2147483648
  %v906 = vmul.f32 %v905, 1.442695
  %v907 = vpow.pop %v906
  %v908 = vadd.f32 %v907, 1.0
  %v909 = vrcp.pop %v908
  %v910 = vmul.f32 %v908, %v909
  %v911 = vsub.f32 1.0, %v910
  %v912 = vmul.f32 %v909, %v911
  %v913 = vadd.f32 %v909, %v912
  %vm914 = vweird.f32 %v908
  %vm915 = vweird.f32 %v909
  %vm916 = vmor %vm914, %vm915
  %v917 = vsel %vm916, %v909, %v913
  %v918 = vand.u32 2147483647, %v908
  %vm919 = vcmp.eq.f32.partialorder %v918, 8.507059e+37
  %v920 = vand.u32 %v908, 2147483648
  %v921 = vor.u32 1.1754944e-38, %v920
  %v922 = vsel %vm919, %v921, %v917
  %v923 = vmul.f32 1.0, %v922
  %v924 = vtanh.pop %v904
  %v925 = vmul.f32 %v923, %v702
  %927 = vrot.lane.b32.xlu0 %v924, 64
  %v928 = vpop.permute.xlu0 %927
  %v930 = vmul.f32 %v923, %v928
  %932 = vrot.lane.b32.xlu0 %v930, 32
  %v933 = vpop.permute.xlu0 %932
  %v935 = vadd.f32 %v925, %v933
  %v936 = vtanh.pop %v935
  %938 = vrot.lane.b32.xlu0 %v936, 64
  %v939 = vpop.permute.xlu0 %938
  %v941 = vmul.f32 %v923, %v939
  %943 = vrot.lane.b32.xlu0 %v941, 32
  %v944 = vpop.permute.xlu0 %943
  %s946 = scalar_lea.vmem %s2, 6
  %947 = vst.msk [vmem:[%s946] sm:$0x3] %vm247, %v944
  %s948 = scalar_lea.vmem %s0, 8
  %v949 = vld [vmem:[%s948] sm:$0x3]
  %v950 = vsel %vm16, %v944, 0
  %952 = vmatpush.msra.mxu0 0.0
  %953 = vmatpush.msra.mxu0 0.0
  %954 = vmatpush.msra.mxu0 0.0
  %955 = vmatpush.msra.mxu0 0.0
  %956 = vmatpush.msra.mxu0 0.0
  %957 = vmatpush.msra.mxu0 0.0
  %958 = vmatpush.msra.mxu0 0.0
  %959 = vmatpush.msra.mxu0 0.0
  %960 = vmatpush.msra.mxu0 0.0
  %961 = vmatpush.msra.mxu0 0.0
  %962 = vmatpush.msra.mxu0 0.0
  %963 = vmatpush.msra.mxu0 0.0
  %v964 = vand.u32 %v14, 4294901760
  %965 = vmatpush.msra.mxu0 %v964
  %v966 = vand.u32 %v13, 4294901760
  %967 = vmatpush.msra.mxu0 %v966
  %v968 = vand.u32 %v12, 4294901760
  %969 = vmatpush.msra.mxu0 %v968
  %v970 = vand.u32 %v11, 4294901760
  %971 = vmatpush.msra.mxu0 %v970
  %v972 = vand.u32 %v950, 4294901760
  %v973 = vsub.f32 %v950, %v972
  %v974 = vand.u32 %v973, 4294901760
  %v975 = vsub.f32 %v973, %v974
  %v976 = vand.u32 %v975, 4294901760
  %977 = vmatmul.f32.gmra.mxu0 %v976
  %v978 = vpop.f32.mrf.mxu0
  %v979 = vadd.f32 0.0, %v978
  %980 = vdwg.mxu0
  %981 = vmatpush.msra.mxu0 0.0
  %982 = vmatpush.msra.mxu0 0.0
  %983 = vmatpush.msra.mxu0 0.0
  %984 = vmatpush.msra.mxu0 0.0
  %985 = vmatpush.msra.mxu0 0.0
  %986 = vmatpush.msra.mxu0 0.0
  %987 = vmatpush.msra.mxu0 0.0
  %988 = vmatpush.msra.mxu0 0.0
  %989 = vmatpush.msra.mxu0 0.0
  %990 = vmatpush.msra.mxu0 0.0
  %991 = vmatpush.msra.mxu0 0.0
  %992 = vmatpush.msra.mxu0 0.0
  %v993 = vand.u32 %v14, 4294901760
  %v994 = vsub.f32 %v14, %v993
  %v995 = vand.u32 %v994, 4294901760
  %v996 = vsub.f32 %v994, %v995
  %v997 = vand.u32 %v996, 4294901760
  %998 = vmatpush.msra.mxu0 %v997
  %v999 = vand.u32 %v13, 4294901760
  %v1000 = vsub.f32 %v13, %v999
  %v1001 = vand.u32 %v1000, 4294901760
  %v1002 = vsub.f32 %v1000, %v1001
  %v1003 = vand.u32 %v1002, 4294901760
  %1004 = vmatpush.msra.mxu0 %v1003
  %v1005 = vand.u32 %v12, 4294901760
  %v1006 = vsub.f32 %v12, %v1005
  %v1007 = vand.u32 %v1006, 4294901760
  %v1008 = vsub.f32 %v1006, %v1007
  %v1009 = vand.u32 %v1008, 4294901760
  %1010 = vmatpush.msra.mxu0 %v1009
  %v1011 = vand.u32 %v11, 4294901760
  %v1012 = vsub.f32 %v11, %v1011
  %v1013 = vand.u32 %v1012, 4294901760
  %v1014 = vsub.f32 %v1012, %v1013
  %v1015 = vand.u32 %v1014, 4294901760
  %1016 = vmatpush.msra.mxu0 %v1015
  %v1017 = vand.u32 %v950, 4294901760
  %1018 = vmatmul.f32.gmra.mxu0 %v1017
  %v1019 = vpop.f32.mrf.mxu0
  %v1020 = vadd.f32 %v979, %v1019
  %1021 = vdwg.mxu0
  %1022 = vmatpush.msra.mxu0 0.0
  %1023 = vmatpush.msra.mxu0 0.0
  %1024 = vmatpush.msra.mxu0 0.0
  %1025 = vmatpush.msra.mxu0 0.0
  %1026 = vmatpush.msra.mxu0 0.0
  %1027 = vmatpush.msra.mxu0 0.0
  %1028 = vmatpush.msra.mxu0 0.0
  %1029 = vmatpush.msra.mxu0 0.0
  %1030 = vmatpush.msra.mxu0 0.0
  %1031 = vmatpush.msra.mxu0 0.0
  %1032 = vmatpush.msra.mxu0 0.0
  %1033 = vmatpush.msra.mxu0 0.0
  %v1034 = vand.u32 %v14, 4294901760
  %v1035 = vsub.f32 %v14, %v1034
  %1036 = vmatpush.msra.mxu0 %v1035
  %v1037 = vand.u32 %v13, 4294901760
  %v1038 = vsub.f32 %v13, %v1037
  %1039 = vmatpush.msra.mxu0 %v1038
  %v1040 = vand.u32 %v12, 4294901760
  %v1041 = vsub.f32 %v12, %v1040
  %1042 = vmatpush.msra.mxu0 %v1041
  %v1043 = vand.u32 %v11, 4294901760
  %v1044 = vsub.f32 %v11, %v1043
  %1045 = vmatpush.msra.mxu0 %v1044
  %v1046 = vand.u32 %v950, 4294901760
  %v1047 = vsub.f32 %v950, %v1046
  %1048 = vmatmul.f32.gmra.mxu0 %v1047
  %v1049 = vpop.f32.mrf.mxu0
  %v1050 = vadd.f32 %v1020, %v1049
  %1051 = vdwg.mxu0
  %1052 = vmatpush.msra.mxu0 0.0
  %1053 = vmatpush.msra.mxu0 0.0
  %1054 = vmatpush.msra.mxu0 0.0
  %1055 = vmatpush.msra.mxu0 0.0
  %1056 = vmatpush.msra.mxu0 0.0
  %1057 = vmatpush.msra.mxu0 0.0
  %1058 = vmatpush.msra.mxu0 0.0
  %1059 = vmatpush.msra.mxu0 0.0
  %1060 = vmatpush.msra.mxu0 0.0
  %1061 = vmatpush.msra.mxu0 0.0
  %1062 = vmatpush.msra.mxu0 0.0
  %1063 = vmatpush.msra.mxu0 0.0
  %v1064 = vand.u32 %v14, 4294901760
  %1065 = vmatpush.msra.mxu0 %v1064
  %v1066 = vand.u32 %v13, 4294901760
  %1067 = vmatpush.msra.mxu0 %v1066
  %v1068 = vand.u32 %v12, 4294901760
  %1069 = vmatpush.msra.mxu0 %v1068
  %v1070 = vand.u32 %v11, 4294901760
  %1071 = vmatpush.msra.mxu0 %v1070
  %v1072 = vand.u32 %v950, 4294901760
  %v1073 = vsub.f32 %v950, %v1072
  %v1074 = vand.u32 %v1073, 4294901760
  %1075 = vmatmul.f32.gmra.mxu0 %v1074
  %v1076 = vpop.f32.mrf.mxu0
  %v1077 = vadd.f32 %v1050, %v1076
  %1078 = vdwg.mxu0
  %1079 = vmatpush.msra.mxu0 0.0
  %1080 = vmatpush.msra.mxu0 0.0
  %1081 = vmatpush.msra.mxu0 0.0
  %1082 = vmatpush.msra.mxu0 0.0
  %1083 = vmatpush.msra.mxu0 0.0
  %1084 = vmatpush.msra.mxu0 0.0
  %1085 = vmatpush.msra.mxu0 0.0
  %1086 = vmatpush.msra.mxu0 0.0
  %1087 = vmatpush.msra.mxu0 0.0
  %1088 = vmatpush.msra.mxu0 0.0
  %1089 = vmatpush.msra.mxu0 0.0
  %1090 = vmatpush.msra.mxu0 0.0
  %v1091 = vand.u32 %v14, 4294901760
  %v1092 = vsub.f32 %v14, %v1091
  %v1093 = vand.u32 %v1092, 4294901760
  %1094 = vmatpush.msra.mxu0 %v1093
  %v1095 = vand.u32 %v13, 4294901760
  %v1096 = vsub.f32 %v13, %v1095
  %v1097 = vand.u32 %v1096, 4294901760
  %1098 = vmatpush.msra.mxu0 %v1097
  %v1099 = vand.u32 %v12, 4294901760
  %v1100 = vsub.f32 %v12, %v1099
  %v1101 = vand.u32 %v1100, 4294901760
  %1102 = vmatpush.msra.mxu0 %v1101
  %v1103 = vand.u32 %v11, 4294901760
  %v1104 = vsub.f32 %v11, %v1103
  %v1105 = vand.u32 %v1104, 4294901760
  %1106 = vmatpush.msra.mxu0 %v1105
  %v1107 = vand.u32 %v950, 4294901760
  %1108 = vmatmul.f32.gmra.mxu0 %v1107
  %v1109 = vpop.f32.mrf.mxu0
  %v1110 = vadd.f32 %v1077, %v1109
  %1111 = vdwg.mxu0
  %1112 = vmatpush.msra.mxu0 0.0
  %1113 = vmatpush.msra.mxu0 0.0
  %1114 = vmatpush.msra.mxu0 0.0
  %1115 = vmatpush.msra.mxu0 0.0
  %1116 = vmatpush.msra.mxu0 0.0
  %1117 = vmatpush.msra.mxu0 0.0
  %1118 = vmatpush.msra.mxu0 0.0
  %1119 = vmatpush.msra.mxu0 0.0
  %1120 = vmatpush.msra.mxu0 0.0
  %1121 = vmatpush.msra.mxu0 0.0
  %1122 = vmatpush.msra.mxu0 0.0
  %1123 = vmatpush.msra.mxu0 0.0
  %v1124 = vand.u32 %v14, 4294901760
  %1125 = vmatpush.msra.mxu0 %v1124
  %v1126 = vand.u32 %v13, 4294901760
  %1127 = vmatpush.msra.mxu0 %v1126
  %v1128 = vand.u32 %v12, 4294901760
  %1129 = vmatpush.msra.mxu0 %v1128
  %v1130 = vand.u32 %v11, 4294901760
  %1131 = vmatpush.msra.mxu0 %v1130
  %v1132 = vand.u32 %v950, 4294901760
  %1133 = vmatmul.f32.gmra.mxu0 %v1132
  %v1134 = vpop.f32.mrf.mxu0
  %v1135 = vadd.f32 %v1110, %v1134
  %1136 = vdwg.mxu0
  %v1137 = vadd.f32 %v949, %v1135
  %v1138 = vxor.u32 %v1137, 2147483648
  %v1139 = vmul.f32 %v1138, 1.442695
  %v1140 = vpow.pop %v1139
  %v1141 = vadd.f32 %v1140, 1.0
  %v1142 = vrcp.pop %v1141
  %v1143 = vmul.f32 %v1141, %v1142
  %v1144 = vsub.f32 1.0, %v1143
  %v1145 = vmul.f32 %v1142, %v1144
  %v1146 = vadd.f32 %v1142, %v1145
  %vm1147 = vweird.f32 %v1141
  %vm1148 = vweird.f32 %v1142
  %vm1149 = vmor %vm1147, %vm1148
  %v1150 = vsel %vm1149, %v1142, %v1146
  %v1151 = vand.u32 2147483647, %v1141
  %vm1152 = vcmp.eq.f32.partialorder %v1151, 8.507059e+37
  %v1153 = vand.u32 %v1141, 2147483648
  %v1154 = vor.u32 1.1754944e-38, %v1153
  %v1155 = vsel %vm1152, %v1154, %v1150
  %v1156 = vmul.f32 1.0, %v1155
  %v1157 = vtanh.pop %v1137
  %v1158 = vmul.f32 %v1156, %v935
  %1160 = vrot.lane.b32.xlu0 %v1157, 64
  %v1161 = vpop.permute.xlu0 %1160
  %v1163 = vmul.f32 %v1156, %v1161
  %1165 = vrot.lane.b32.xlu0 %v1163, 32
  %v1166 = vpop.permute.xlu0 %1165
  %v1168 = vadd.f32 %v1158, %v1166
  %v1169 = vtanh.pop %v1168
  %1171 = vrot.lane.b32.xlu0 %v1169, 64
  %v1172 = vpop.permute.xlu0 %1171
  %v1174 = vmul.f32 %v1156, %v1172
  %1176 = vrot.lane.b32.xlu0 %v1174, 32
  %v1177 = vpop.permute.xlu0 %1176
  %s1179 = scalar_lea.vmem %s2, 8
  %1180 = vst.msk [vmem:[%s1179] sm:$0x3] %vm247, %v1177
  %s1181 = scalar_lea.vmem %s0, 10
  %v1182 = vld [vmem:[%s1181] sm:$0x3]
  %v1183 = vsel %vm16, %v1177, 0
  %1185 = vmatpush.msra.mxu0 0.0
  %1186 = vmatpush.msra.mxu0 0.0
  %1187 = vmatpush.msra.mxu0 0.0
  %1188 = vmatpush.msra.mxu0 0.0
  %1189 = vmatpush.msra.mxu0 0.0
  %1190 = vmatpush.msra.mxu0 0.0
  %1191 = vmatpush.msra.mxu0 0.0
  %1192 = vmatpush.msra.mxu0 0.0
  %1193 = vmatpush.msra.mxu0 0.0
  %1194 = vmatpush.msra.mxu0 0.0
  %1195 = vmatpush.msra.mxu0 0.0
  %1196 = vmatpush.msra.mxu0 0.0
  %v1197 = vand.u32 %v14, 4294901760
  %1198 = vmatpush.msra.mxu0 %v1197
  %v1199 = vand.u32 %v13, 4294901760
  %1200 = vmatpush.msra.mxu0 %v1199
  %v1201 = vand.u32 %v12, 4294901760
  %1202 = vmatpush.msra.mxu0 %v1201
  %v1203 = vand.u32 %v11, 4294901760
  %1204 = vmatpush.msra.mxu0 %v1203
  %v1205 = vand.u32 %v1183, 4294901760
  %v1206 = vsub.f32 %v1183, %v1205
  %v1207 = vand.u32 %v1206, 4294901760
  %v1208 = vsub.f32 %v1206, %v1207
  %v1209 = vand.u32 %v1208, 4294901760
  %1210 = vmatmul.f32.gmra.mxu0 %v1209
  %v1211 = vpop.f32.mrf.mxu0
  %v1212 = vadd.f32 0.0, %v1211
  %1213 = vdwg.mxu0
  %1214 = vmatpush.msra.mxu0 0.0
  %1215 = vmatpush.msra.mxu0 0.0
  %1216 = vmatpush.msra.mxu0 0.0
  %1217 = vmatpush.msra.mxu0 0.0
  %1218 = vmatpush.msra.mxu0 0.0
  %1219 = vmatpush.msra.mxu0 0.0
  %1220 = vmatpush.msra.mxu0 0.0
  %1221 = vmatpush.msra.mxu0 0.0
  %1222 = vmatpush.msra.mxu0 0.0
  %1223 = vmatpush.msra.mxu0 0.0
  %1224 = vmatpush.msra.mxu0 0.0
  %1225 = vmatpush.msra.mxu0 0.0
  %v1226 = vand.u32 %v14, 4294901760
  %v1227 = vsub.f32 %v14, %v1226
  %v1228 = vand.u32 %v1227, 4294901760
  %v1229 = vsub.f32 %v1227, %v1228
  %v1230 = vand.u32 %v1229, 4294901760
  %1231 = vmatpush.msra.mxu0 %v1230
  %v1232 = vand.u32 %v13, 4294901760
  %v1233 = vsub.f32 %v13, %v1232
  %v1234 = vand.u32 %v1233, 4294901760
  %v1235 = vsub.f32 %v1233, %v1234
  %v1236 = vand.u32 %v1235, 4294901760
  %1237 = vmatpush.msra.mxu0 %v1236
  %v1238 = vand.u32 %v12, 4294901760
  %v1239 = vsub.f32 %v12, %v1238
  %v1240 = vand.u32 %v1239, 4294901760
  %v1241 = vsub.f32 %v1239, %v1240
  %v1242 = vand.u32 %v1241, 4294901760
  %1243 = vmatpush.msra.mxu0 %v1242
  %v1244 = vand.u32 %v11, 4294901760
  %v1245 = vsub.f32 %v11, %v1244
  %v1246 = vand.u32 %v1245, 4294901760
  %v1247 = vsub.f32 %v1245, %v1246
  %v1248 = vand.u32 %v1247, 4294901760
  %1249 = vmatpush.msra.mxu0 %v1248
  %v1250 = vand.u32 %v1183, 4294901760
  %1251 = vmatmul.f32.gmra.mxu0 %v1250
  %v1252 = vpop.f32.mrf.mxu0
  %v1253 = vadd.f32 %v1212, %v1252
  %1254 = vdwg.mxu0
  %1255 = vmatpush.msra.mxu0 0.0
  %1256 = vmatpush.msra.mxu0 0.0
  %1257 = vmatpush.msra.mxu0 0.0
  %1258 = vmatpush.msra.mxu0 0.0
  %1259 = vmatpush.msra.mxu0 0.0
  %1260 = vmatpush.msra.mxu0 0.0
  %1261 = vmatpush.msra.mxu0 0.0
  %1262 = vmatpush.msra.mxu0 0.0
  %1263 = vmatpush.msra.mxu0 0.0
  %1264 = vmatpush.msra.mxu0 0.0
  %1265 = vmatpush.msra.mxu0 0.0
  %1266 = vmatpush.msra.mxu0 0.0
  %v1267 = vand.u32 %v14, 4294901760
  %v1268 = vsub.f32 %v14, %v1267
  %1269 = vmatpush.msra.mxu0 %v1268
  %v1270 = vand.u32 %v13, 4294901760
  %v1271 = vsub.f32 %v13, %v1270
  %1272 = vmatpush.msra.mxu0 %v1271
  %v1273 = vand.u32 %v12, 4294901760
  %v1274 = vsub.f32 %v12, %v1273
  %1275 = vmatpush.msra.mxu0 %v1274
  %v1276 = vand.u32 %v11, 4294901760
  %v1277 = vsub.f32 %v11, %v1276
  %1278 = vmatpush.msra.mxu0 %v1277
  %v1279 = vand.u32 %v1183, 4294901760
  %v1280 = vsub.f32 %v1183, %v1279
  %1281 = vmatmul.f32.gmra.mxu0 %v1280
  %v1282 = vpop.f32.mrf.mxu0
  %v1283 = vadd.f32 %v1253, %v1282
  %1284 = vdwg.mxu0
  %1285 = vmatpush.msra.mxu0 0.0
  %1286 = vmatpush.msra.mxu0 0.0
  %1287 = vmatpush.msra.mxu0 0.0
  %1288 = vmatpush.msra.mxu0 0.0
  %1289 = vmatpush.msra.mxu0 0.0
  %1290 = vmatpush.msra.mxu0 0.0
  %1291 = vmatpush.msra.mxu0 0.0
  %1292 = vmatpush.msra.mxu0 0.0
  %1293 = vmatpush.msra.mxu0 0.0
  %1294 = vmatpush.msra.mxu0 0.0
  %1295 = vmatpush.msra.mxu0 0.0
  %1296 = vmatpush.msra.mxu0 0.0
  %v1297 = vand.u32 %v14, 4294901760
  %1298 = vmatpush.msra.mxu0 %v1297
  %v1299 = vand.u32 %v13, 4294901760
  %1300 = vmatpush.msra.mxu0 %v1299
  %v1301 = vand.u32 %v12, 4294901760
  %1302 = vmatpush.msra.mxu0 %v1301
  %v1303 = vand.u32 %v11, 4294901760
  %1304 = vmatpush.msra.mxu0 %v1303
  %v1305 = vand.u32 %v1183, 4294901760
  %v1306 = vsub.f32 %v1183, %v1305
  %v1307 = vand.u32 %v1306, 4294901760
  %1308 = vmatmul.f32.gmra.mxu0 %v1307
  %v1309 = vpop.f32.mrf.mxu0
  %v1310 = vadd.f32 %v1283, %v1309
  %1311 = vdwg.mxu0
  %1312 = vmatpush.msra.mxu0 0.0
  %1313 = vmatpush.msra.mxu0 0.0
  %1314 = vmatpush.msra.mxu0 0.0
  %1315 = vmatpush.msra.mxu0 0.0
  %1316 = vmatpush.msra.mxu0 0.0
  %1317 = vmatpush.msra.mxu0 0.0
  %1318 = vmatpush.msra.mxu0 0.0
  %1319 = vmatpush.msra.mxu0 0.0
  %1320 = vmatpush.msra.mxu0 0.0
  %1321 = vmatpush.msra.mxu0 0.0
  %1322 = vmatpush.msra.mxu0 0.0
  %1323 = vmatpush.msra.mxu0 0.0
  %v1324 = vand.u32 %v14, 4294901760
  %v1325 = vsub.f32 %v14, %v1324
  %v1326 = vand.u32 %v1325, 4294901760
  %1327 = vmatpush.msra.mxu0 %v1326
  %v1328 = vand.u32 %v13, 4294901760
  %v1329 = vsub.f32 %v13, %v1328
  %v1330 = vand.u32 %v1329, 4294901760
  %1331 = vmatpush.msra.mxu0 %v1330
  %v1332 = vand.u32 %v12, 4294901760
  %v1333 = vsub.f32 %v12, %v1332
  %v1334 = vand.u32 %v1333, 4294901760
  %1335 = vmatpush.msra.mxu0 %v1334
  %v1336 = vand.u32 %v11, 4294901760
  %v1337 = vsub.f32 %v11, %v1336
  %v1338 = vand.u32 %v1337, 4294901760
  %1339 = vmatpush.msra.mxu0 %v1338
  %v1340 = vand.u32 %v1183, 4294901760
  %1341 = vmatmul.f32.gmra.mxu0 %v1340
  %v1342 = vpop.f32.mrf.mxu0
  %v1343 = vadd.f32 %v1310, %v1342
  %1344 = vdwg.mxu0
  %1345 = vmatpush.msra.mxu0 0.0
  %1346 = vmatpush.msra.mxu0 0.0
  %1347 = vmatpush.msra.mxu0 0.0
  %1348 = vmatpush.msra.mxu0 0.0
  %1349 = vmatpush.msra.mxu0 0.0
  %1350 = vmatpush.msra.mxu0 0.0
  %1351 = vmatpush.msra.mxu0 0.0
  %1352 = vmatpush.msra.mxu0 0.0
  %1353 = vmatpush.msra.mxu0 0.0
  %1354 = vmatpush.msra.mxu0 0.0
  %1355 = vmatpush.msra.mxu0 0.0
  %1356 = vmatpush.msra.mxu0 0.0
  %v1357 = vand.u32 %v14, 4294901760
  %1358 = vmatpush.msra.mxu0 %v1357
  %v1359 = vand.u32 %v13, 4294901760
  %1360 = vmatpush.msra.mxu0 %v1359
  %v1361 = vand.u32 %v12, 4294901760
  %1362 = vmatpush.msra.mxu0 %v1361
  %v1363 = vand.u32 %v11, 4294901760
  %1364 = vmatpush.msra.mxu0 %v1363
  %v1365 = vand.u32 %v1183, 4294901760
  %1366 = vmatmul.f32.gmra.mxu0 %v1365
  %v1367 = vpop.f32.mrf.mxu0
  %v1368 = vadd.f32 %v1343, %v1367
  %1369 = vdwg.mxu0
  %v1370 = vadd.f32 %v1182, %v1368
  %v1371 = vxor.u32 %v1370, 2147483648
  %v1372 = vmul.f32 %v1371, 1.442695
  %v1373 = vpow.pop %v1372
  %v1374 = vadd.f32 %v1373, 1.0
  %v1375 = vrcp.pop %v1374
  %v1376 = vmul.f32 %v1374, %v1375
  %v1377 = vsub.f32 1.0, %v1376
  %v1378 = vmul.f32 %v1375, %v1377
  %v1379 = vadd.f32 %v1375, %v1378
  %vm1380 = vweird.f32 %v1374
  %vm1381 = vweird.f32 %v1375
  %vm1382 = vmor %vm1380, %vm1381
  %v1383 = vsel %vm1382, %v1375, %v1379
  %v1384 = vand.u32 2147483647, %v1374
  %vm1385 = vcmp.eq.f32.partialorder %v1384, 8.507059e+37
  %v1386 = vand.u32 %v1374, 2147483648
  %v1387 = vor.u32 1.1754944e-38, %v1386
  %v1388 = vsel %vm1385, %v1387, %v1383
  %v1389 = vmul.f32 1.0, %v1388
  %v1390 = vtanh.pop %v1370
  %v1391 = vmul.f32 %v1389, %v1168
  %1393 = vrot.lane.b32.xlu0 %v1390, 64
  %v1394 = vpop.permute.xlu0 %1393
  %v1396 = vmul.f32 %v1389, %v1394
  %1398 = vrot.lane.b32.xlu0 %v1396, 32
  %v1399 = vpop.permute.xlu0 %1398
  %v1401 = vadd.f32 %v1391, %v1399
  %v1402 = vtanh.pop %v1401
  %1404 = vrot.lane.b32.xlu0 %v1402, 64
  %v1405 = vpop.permute.xlu0 %1404
  %v1407 = vmul.f32 %v1389, %v1405
  %1409 = vrot.lane.b32.xlu0 %v1407, 32
  %v1410 = vpop.permute.xlu0 %1409
  %s1412 = scalar_lea.vmem %s2, 10
  %1413 = vst.msk [vmem:[%s1412] sm:$0x3] %vm247, %v1410
  %s1414 = scalar_lea.vmem %s0, 12
  %v1415 = vld [vmem:[%s1414] sm:$0x3]
  %v1416 = vsel %vm16, %v1410, 0
  %1418 = vmatpush.msra.mxu0 0.0
  %1419 = vmatpush.msra.mxu0 0.0
  %1420 = vmatpush.msra.mxu0 0.0
  %1421 = vmatpush.msra.mxu0 0.0
  %1422 = vmatpush.msra.mxu0 0.0
  %1423 = vmatpush.msra.mxu0 0.0
  %1424 = vmatpush.msra.mxu0 0.0
  %1425 = vmatpush.msra.mxu0 0.0
  %1426 = vmatpush.msra.mxu0 0.0
  %1427 = vmatpush.msra.mxu0 0.0
  %1428 = vmatpush.msra.mxu0 0.0
  %1429 = vmatpush.msra.mxu0 0.0
  %v1430 = vand.u32 %v14, 4294901760
  %1431 = vmatpush.msra.mxu0 %v1430
  %v1432 = vand.u32 %v13, 4294901760
  %1433 = vmatpush.msra.mxu0 %v1432
  %v1434 = vand.u32 %v12, 4294901760
  %1435 = vmatpush.msra.mxu0 %v1434
  %v1436 = vand.u32 %v11, 4294901760
  %1437 = vmatpush.msra.mxu0 %v1436
  %v1438 = vand.u32 %v1416, 4294901760
  %v1439 = vsub.f32 %v1416, %v1438
  %v1440 = vand.u32 %v1439, 4294901760
  %v1441 = vsub.f32 %v1439, %v1440
  %v1442 = vand.u32 %v1441, 4294901760
  %1443 = vmatmul.f32.gmra.mxu0 %v1442
  %v1444 = vpop.f32.mrf.mxu0
  %v1445 = vadd.f32 0.0, %v1444
  %1446 = vdwg.mxu0
  %1447 = vmatpush.msra.mxu0 0.0
  %1448 = vmatpush.msra.mxu0 0.0
  %1449 = vmatpush.msra.mxu0 0.0
  %1450 = vmatpush.msra.mxu0 0.0
  %1451 = vmatpush.msra.mxu0 0.0
  %1452 = vmatpush.msra.mxu0 0.0
  %1453 = vmatpush.msra.mxu0 0.0
  %1454 = vmatpush.msra.mxu0 0.0
  %1455 = vmatpush.msra.mxu0 0.0
  %1456 = vmatpush.msra.mxu0 0.0
  %1457 = vmatpush.msra.mxu0 0.0
  %1458 = vmatpush.msra.mxu0 0.0
  %v1459 = vand.u32 %v14, 4294901760
  %v1460 = vsub.f32 %v14, %v1459
  %v1461 = vand.u32 %v1460, 4294901760
  %v1462 = vsub.f32 %v1460, %v1461
  %v1463 = vand.u32 %v1462, 4294901760
  %1464 = vmatpush.msra.mxu0 %v1463
  %v1465 = vand.u32 %v13, 4294901760
  %v1466 = vsub.f32 %v13, %v1465
  %v1467 = vand.u32 %v1466, 4294901760
  %v1468 = vsub.f32 %v1466, %v1467
  %v1469 = vand.u32 %v1468, 4294901760
  %1470 = vmatpush.msra.mxu0 %v1469
  %v1471 = vand.u32 %v12, 4294901760
  %v1472 = vsub.f32 %v12, %v1471
  %v1473 = vand.u32 %v1472, 4294901760
  %v1474 = vsub.f32 %v1472, %v1473
  %v1475 = vand.u32 %v1474, 4294901760
  %1476 = vmatpush.msra.mxu0 %v1475
  %v1477 = vand.u32 %v11, 4294901760
  %v1478 = vsub.f32 %v11, %v1477
  %v1479 = vand.u32 %v1478, 4294901760
  %v1480 = vsub.f32 %v1478, %v1479
  %v1481 = vand.u32 %v1480, 4294901760
  %1482 = vmatpush.msra.mxu0 %v1481
  %v1483 = vand.u32 %v1416, 4294901760
  %1484 = vmatmul.f32.gmra.mxu0 %v1483
  %v1485 = vpop.f32.mrf.mxu0
  %v1486 = vadd.f32 %v1445, %v1485
  %1487 = vdwg.mxu0
  %1488 = vmatpush.msra.mxu0 0.0
  %1489 = vmatpush.msra.mxu0 0.0
  %1490 = vmatpush.msra.mxu0 0.0
  %1491 = vmatpush.msra.mxu0 0.0
  %1492 = vmatpush.msra.mxu0 0.0
  %1493 = vmatpush.msra.mxu0 0.0
  %1494 = vmatpush.msra.mxu0 0.0
  %1495 = vmatpush.msra.mxu0 0.0
  %1496 = vmatpush.msra.mxu0 0.0
  %1497 = vmatpush.msra.mxu0 0.0
  %1498 = vmatpush.msra.mxu0 0.0
  %1499 = vmatpush.msra.mxu0 0.0
  %v1500 = vand.u32 %v14, 4294901760
  %v1501 = vsub.f32 %v14, %v1500
  %1502 = vmatpush.msra.mxu0 %v1501
  %v1503 = vand.u32 %v13, 4294901760
  %v1504 = vsub.f32 %v13, %v1503
  %1505 = vmatpush.msra.mxu0 %v1504
  %v1506 = vand.u32 %v12, 4294901760
  %v1507 = vsub.f32 %v12, %v1506
  %1508 = vmatpush.msra.mxu0 %v1507
  %v1509 = vand.u32 %v11, 4294901760
  %v1510 = vsub.f32 %v11, %v1509
  %1511 = vmatpush.msra.mxu0 %v1510
  %v1512 = vand.u32 %v1416, 4294901760
  %v1513 = vsub.f32 %v1416, %v1512
  %1514 = vmatmul.f32.gmra.mxu0 %v1513
  %v1515 = vpop.f32.mrf.mxu0
  %v1516 = vadd.f32 %v1486, %v1515
  %1517 = vdwg.mxu0
  %1518 = vmatpush.msra.mxu0 0.0
  %1519 = vmatpush.msra.mxu0 0.0
  %1520 = vmatpush.msra.mxu0 0.0
  %1521 = vmatpush.msra.mxu0 0.0
  %1522 = vmatpush.msra.mxu0 0.0
  %1523 = vmatpush.msra.mxu0 0.0
  %1524 = vmatpush.msra.mxu0 0.0
  %1525 = vmatpush.msra.mxu0 0.0
  %1526 = vmatpush.msra.mxu0 0.0
  %1527 = vmatpush.msra.mxu0 0.0
  %1528 = vmatpush.msra.mxu0 0.0
  %1529 = vmatpush.msra.mxu0 0.0
  %v1530 = vand.u32 %v14, 4294901760
  %1531 = vmatpush.msra.mxu0 %v1530
  %v1532 = vand.u32 %v13, 4294901760
  %1533 = vmatpush.msra.mxu0 %v1532
  %v1534 = vand.u32 %v12, 4294901760
  %1535 = vmatpush.msra.mxu0 %v1534
  %v1536 = vand.u32 %v11, 4294901760
  %1537 = vmatpush.msra.mxu0 %v1536
  %v1538 = vand.u32 %v1416, 4294901760
  %v1539 = vsub.f32 %v1416, %v1538
  %v1540 = vand.u32 %v1539, 4294901760
  %1541 = vmatmul.f32.gmra.mxu0 %v1540
  %v1542 = vpop.f32.mrf.mxu0
  %v1543 = vadd.f32 %v1516, %v1542
  %1544 = vdwg.mxu0
  %1545 = vmatpush.msra.mxu0 0.0
  %1546 = vmatpush.msra.mxu0 0.0
  %1547 = vmatpush.msra.mxu0 0.0
  %1548 = vmatpush.msra.mxu0 0.0
  %1549 = vmatpush.msra.mxu0 0.0
  %1550 = vmatpush.msra.mxu0 0.0
  %1551 = vmatpush.msra.mxu0 0.0
  %1552 = vmatpush.msra.mxu0 0.0
  %1553 = vmatpush.msra.mxu0 0.0
  %1554 = vmatpush.msra.mxu0 0.0
  %1555 = vmatpush.msra.mxu0 0.0
  %1556 = vmatpush.msra.mxu0 0.0
  %v1557 = vand.u32 %v14, 4294901760
  %v1558 = vsub.f32 %v14, %v1557
  %v1559 = vand.u32 %v1558, 4294901760
  %1560 = vmatpush.msra.mxu0 %v1559
  %v1561 = vand.u32 %v13, 4294901760
  %v1562 = vsub.f32 %v13, %v1561
  %v1563 = vand.u32 %v1562, 4294901760
  %1564 = vmatpush.msra.mxu0 %v1563
  %v1565 = vand.u32 %v12, 4294901760
  %v1566 = vsub.f32 %v12, %v1565
  %v1567 = vand.u32 %v1566, 4294901760
  %1568 = vmatpush.msra.mxu0 %v1567
  %v1569 = vand.u32 %v11, 4294901760
  %v1570 = vsub.f32 %v11, %v1569
  %v1571 = vand.u32 %v1570, 4294901760
  %1572 = vmatpush.msra.mxu0 %v1571
  %v1573 = vand.u32 %v1416, 4294901760
  %1574 = vmatmul.f32.gmra.mxu0 %v1573
  %v1575 = vpop.f32.mrf.mxu0
  %v1576 = vadd.f32 %v1543, %v1575
  %1577 = vdwg.mxu0
  %1578 = vmatpush.msra.mxu0 0.0
  %1579 = vmatpush.msra.mxu0 0.0
  %1580 = vmatpush.msra.mxu0 0.0
  %1581 = vmatpush.msra.mxu0 0.0
  %1582 = vmatpush.msra.mxu0 0.0
  %1583 = vmatpush.msra.mxu0 0.0
  %1584 = vmatpush.msra.mxu0 0.0
  %1585 = vmatpush.msra.mxu0 0.0
  %1586 = vmatpush.msra.mxu0 0.0
  %1587 = vmatpush.msra.mxu0 0.0
  %1588 = vmatpush.msra.mxu0 0.0
  %1589 = vmatpush.msra.mxu0 0.0
  %v1590 = vand.u32 %v14, 4294901760
  %1591 = vmatpush.msra.mxu0 %v1590
  %v1592 = vand.u32 %v13, 4294901760
  %1593 = vmatpush.msra.mxu0 %v1592
  %v1594 = vand.u32 %v12, 4294901760
  %1595 = vmatpush.msra.mxu0 %v1594
  %v1596 = vand.u32 %v11, 4294901760
  %1597 = vmatpush.msra.mxu0 %v1596
  %v1598 = vand.u32 %v1416, 4294901760
  %1599 = vmatmul.f32.gmra.mxu0 %v1598
  %v1600 = vpop.f32.mrf.mxu0
  %v1601 = vadd.f32 %v1576, %v1600
  %1602 = vdwg.mxu0
  %v1603 = vadd.f32 %v1415, %v1601
  %v1604 = vxor.u32 %v1603, 2147483648
  %v1605 = vmul.f32 %v1604, 1.442695
  %v1606 = vpow.pop %v1605
  %v1607 = vadd.f32 %v1606, 1.0
  %v1608 = vrcp.pop %v1607
  %v1609 = vmul.f32 %v1607, %v1608
  %v1610 = vsub.f32 1.0, %v1609
  %v1611 = vmul.f32 %v1608, %v1610
  %v1612 = vadd.f32 %v1608, %v1611
  %vm1613 = vweird.f32 %v1607
  %vm1614 = vweird.f32 %v1608
  %vm1615 = vmor %vm1613, %vm1614
  %v1616 = vsel %vm1615, %v1608, %v1612
  %v1617 = vand.u32 2147483647, %v1607
  %vm1618 = vcmp.eq.f32.partialorder %v1617, 8.507059e+37
  %v1619 = vand.u32 %v1607, 2147483648
  %v1620 = vor.u32 1.1754944e-38, %v1619
  %v1621 = vsel %vm1618, %v1620, %v1616
  %v1622 = vmul.f32 1.0, %v1621
  %v1623 = vtanh.pop %v1603
  %v1624 = vmul.f32 %v1622, %v1401
  %1626 = vrot.lane.b32.xlu0 %v1623, 64
  %v1627 = vpop.permute.xlu0 %1626
  %v1629 = vmul.f32 %v1622, %v1627
  %1631 = vrot.lane.b32.xlu0 %v1629, 32
  %v1632 = vpop.permute.xlu0 %1631
  %v1634 = vadd.f32 %v1624, %v1632
  %v1635 = vtanh.pop %v1634
  %1637 = vrot.lane.b32.xlu0 %v1635, 64
  %v1638 = vpop.permute.xlu0 %1637
  %v1640 = vmul.f32 %v1622, %v1638
  %1642 = vrot.lane.b32.xlu0 %v1640, 32
  %v1643 = vpop.permute.xlu0 %1642
  %s1645 = scalar_lea.vmem %s2, 12
  %1646 = vst.msk [vmem:[%s1645] sm:$0x3] %vm247, %v1643
  %s1647 = scalar_lea.vmem %s0, 14
  %v1648 = vld [vmem:[%s1647] sm:$0x3]
  %v1649 = vsel %vm16, %v1643, 0
  %1651 = vmatpush.msra.mxu0 0.0
  %1652 = vmatpush.msra.mxu0 0.0
  %1653 = vmatpush.msra.mxu0 0.0
  %1654 = vmatpush.msra.mxu0 0.0
  %1655 = vmatpush.msra.mxu0 0.0
  %1656 = vmatpush.msra.mxu0 0.0
  %1657 = vmatpush.msra.mxu0 0.0
  %1658 = vmatpush.msra.mxu0 0.0
  %1659 = vmatpush.msra.mxu0 0.0
  %1660 = vmatpush.msra.mxu0 0.0
  %1661 = vmatpush.msra.mxu0 0.0
  %1662 = vmatpush.msra.mxu0 0.0
  %v1663 = vand.u32 %v14, 4294901760
  %1664 = vmatpush.msra.mxu0 %v1663
  %v1665 = vand.u32 %v13, 4294901760
  %1666 = vmatpush.msra.mxu0 %v1665
  %v1667 = vand.u32 %v12, 4294901760
  %1668 = vmatpush.msra.mxu0 %v1667
  %v1669 = vand.u32 %v11, 4294901760
  %1670 = vmatpush.msra.mxu0 %v1669
  %v1671 = vand.u32 %v1649, 4294901760
  %v1672 = vsub.f32 %v1649, %v1671
  %v1673 = vand.u32 %v1672, 4294901760
  %v1674 = vsub.f32 %v1672, %v1673
  %v1675 = vand.u32 %v1674, 4294901760
  %1676 = vmatmul.f32.gmra.mxu0 %v1675
  %v1677 = vpop.f32.mrf.mxu0
  %v1678 = vadd.f32 0.0, %v1677
  %1679 = vdwg.mxu0
  %1680 = vmatpush.msra.mxu0 0.0
  %1681 = vmatpush.msra.mxu0 0.0
  %1682 = vmatpush.msra.mxu0 0.0
  %1683 = vmatpush.msra.mxu0 0.0
  %1684 = vmatpush.msra.mxu0 0.0
  %1685 = vmatpush.msra.mxu0 0.0
  %1686 = vmatpush.msra.mxu0 0.0
  %1687 = vmatpush.msra.mxu0 0.0
  %1688 = vmatpush.msra.mxu0 0.0
  %1689 = vmatpush.msra.mxu0 0.0
  %1690 = vmatpush.msra.mxu0 0.0
  %1691 = vmatpush.msra.mxu0 0.0
  %v1692 = vand.u32 %v14, 4294901760
  %v1693 = vsub.f32 %v14, %v1692
  %v1694 = vand.u32 %v1693, 4294901760
  %v1695 = vsub.f32 %v1693, %v1694
  %v1696 = vand.u32 %v1695, 4294901760
  %1697 = vmatpush.msra.mxu0 %v1696
  %v1698 = vand.u32 %v13, 4294901760
  %v1699 = vsub.f32 %v13, %v1698
  %v1700 = vand.u32 %v1699, 4294901760
  %v1701 = vsub.f32 %v1699, %v1700
  %v1702 = vand.u32 %v1701, 4294901760
  %1703 = vmatpush.msra.mxu0 %v1702
  %v1704 = vand.u32 %v12, 4294901760
  %v1705 = vsub.f32 %v12, %v1704
  %v1706 = vand.u32 %v1705, 4294901760
  %v1707 = vsub.f32 %v1705, %v1706
  %v1708 = vand.u32 %v1707, 4294901760
  %1709 = vmatpush.msra.mxu0 %v1708
  %v1710 = vand.u32 %v11, 4294901760
  %v1711 = vsub.f32 %v11, %v1710
  %v1712 = vand.u32 %v1711, 4294901760
  %v1713 = vsub.f32 %v1711, %v1712
  %v1714 = vand.u32 %v1713, 4294901760
  %1715 = vmatpush.msra.mxu0 %v1714
  %v1716 = vand.u32 %v1649, 4294901760
  %1717 = vmatmul.f32.gmra.mxu0 %v1716
  %v1718 = vpop.f32.mrf.mxu0
  %v1719 = vadd.f32 %v1678, %v1718
  %1720 = vdwg.mxu0
  %1721 = vmatpush.msra.mxu0 0.0
  %1722 = vmatpush.msra.mxu0 0.0
  %1723 = vmatpush.msra.mxu0 0.0
  %1724 = vmatpush.msra.mxu0 0.0
  %1725 = vmatpush.msra.mxu0 0.0
  %1726 = vmatpush.msra.mxu0 0.0
  %1727 = vmatpush.msra.mxu0 0.0
  %1728 = vmatpush.msra.mxu0 0.0
  %1729 = vmatpush.msra.mxu0 0.0
  %1730 = vmatpush.msra.mxu0 0.0
  %1731 = vmatpush.msra.mxu0 0.0
  %1732 = vmatpush.msra.mxu0 0.0
  %v1733 = vand.u32 %v14, 4294901760
  %v1734 = vsub.f32 %v14, %v1733
  %1735 = vmatpush.msra.mxu0 %v1734
  %v1736 = vand.u32 %v13, 4294901760
  %v1737 = vsub.f32 %v13, %v1736
  %1738 = vmatpush.msra.mxu0 %v1737
  %v1739 = vand.u32 %v12, 4294901760
  %v1740 = vsub.f32 %v12, %v1739
  %1741 = vmatpush.msra.mxu0 %v1740
  %v1742 = vand.u32 %v11, 4294901760
  %v1743 = vsub.f32 %v11, %v1742
  %1744 = vmatpush.msra.mxu0 %v1743
  %v1745 = vand.u32 %v1649, 4294901760
  %v1746 = vsub.f32 %v1649, %v1745
  %1747 = vmatmul.f32.gmra.mxu0 %v1746
  %v1748 = vpop.f32.mrf.mxu0
  %v1749 = vadd.f32 %v1719, %v1748
  %1750 = vdwg.mxu0
  %1751 = vmatpush.msra.mxu0 0.0
  %1752 = vmatpush.msra.mxu0 0.0
  %1753 = vmatpush.msra.mxu0 0.0
  %1754 = vmatpush.msra.mxu0 0.0
  %1755 = vmatpush.msra.mxu0 0.0
  %1756 = vmatpush.msra.mxu0 0.0
  %1757 = vmatpush.msra.mxu0 0.0
  %1758 = vmatpush.msra.mxu0 0.0
  %1759 = vmatpush.msra.mxu0 0.0
  %1760 = vmatpush.msra.mxu0 0.0
  %1761 = vmatpush.msra.mxu0 0.0
  %1762 = vmatpush.msra.mxu0 0.0
  %v1763 = vand.u32 %v14, 4294901760
  %1764 = vmatpush.msra.mxu0 %v1763
  %v1765 = vand.u32 %v13, 4294901760
  %1766 = vmatpush.msra.mxu0 %v1765
  %v1767 = vand.u32 %v12, 4294901760
  %1768 = vmatpush.msra.mxu0 %v1767
  %v1769 = vand.u32 %v11, 4294901760
  %1770 = vmatpush.msra.mxu0 %v1769
  %v1771 = vand.u32 %v1649, 4294901760
  %v1772 = vsub.f32 %v1649, %v1771
  %v1773 = vand.u32 %v1772, 4294901760
  %1774 = vmatmul.f32.gmra.mxu0 %v1773
  %v1775 = vpop.f32.mrf.mxu0
  %v1776 = vadd.f32 %v1749, %v1775
  %1777 = vdwg.mxu0
  %1778 = vmatpush.msra.mxu0 0.0
  %1779 = vmatpush.msra.mxu0 0.0
  %1780 = vmatpush.msra.mxu0 0.0
  %1781 = vmatpush.msra.mxu0 0.0
  %1782 = vmatpush.msra.mxu0 0.0
  %1783 = vmatpush.msra.mxu0 0.0
  %1784 = vmatpush.msra.mxu0 0.0
  %1785 = vmatpush.msra.mxu0 0.0
  %1786 = vmatpush.msra.mxu0 0.0
  %1787 = vmatpush.msra.mxu0 0.0
  %1788 = vmatpush.msra.mxu0 0.0
  %1789 = vmatpush.msra.mxu0 0.0
  %v1790 = vand.u32 %v14, 4294901760
  %v1791 = vsub.f32 %v14, %v1790
  %v1792 = vand.u32 %v1791, 4294901760
  %1793 = vmatpush.msra.mxu0 %v1792
  %v1794 = vand.u32 %v13, 4294901760
  %v1795 = vsub.f32 %v13, %v1794
  %v1796 = vand.u32 %v1795, 4294901760
  %1797 = vmatpush.msra.mxu0 %v1796
  %v1798 = vand.u32 %v12, 4294901760
  %v1799 = vsub.f32 %v12, %v1798
  %v1800 = vand.u32 %v1799, 4294901760
  %1801 = vmatpush.msra.mxu0 %v1800
  %v1802 = vand.u32 %v11, 4294901760
  %v1803 = vsub.f32 %v11, %v1802
  %v1804 = vand.u32 %v1803, 4294901760
  %1805 = vmatpush.msra.mxu0 %v1804
  %v1806 = vand.u32 %v1649, 4294901760
  %1807 = vmatmul.f32.gmra.mxu0 %v1806
  %v1808 = vpop.f32.mrf.mxu0
  %v1809 = vadd.f32 %v1776, %v1808
  %1810 = vdwg.mxu0
  %1811 = vmatpush.msra.mxu0 0.0
  %1812 = vmatpush.msra.mxu0 0.0
  %1813 = vmatpush.msra.mxu0 0.0
  %1814 = vmatpush.msra.mxu0 0.0
  %1815 = vmatpush.msra.mxu0 0.0
  %1816 = vmatpush.msra.mxu0 0.0
  %1817 = vmatpush.msra.mxu0 0.0
  %1818 = vmatpush.msra.mxu0 0.0
  %1819 = vmatpush.msra.mxu0 0.0
  %1820 = vmatpush.msra.mxu0 0.0
  %1821 = vmatpush.msra.mxu0 0.0
  %1822 = vmatpush.msra.mxu0 0.0
  %v1823 = vand.u32 %v14, 4294901760
  %1824 = vmatpush.msra.mxu0 %v1823
  %v1825 = vand.u32 %v13, 4294901760
  %1826 = vmatpush.msra.mxu0 %v1825
  %v1827 = vand.u32 %v12, 4294901760
  %1828 = vmatpush.msra.mxu0 %v1827
  %v1829 = vand.u32 %v11, 4294901760
  %1830 = vmatpush.msra.mxu0 %v1829
  %v1831 = vand.u32 %v1649, 4294901760
  %1832 = vmatmul.f32.gmra.mxu0 %v1831
  %v1833 = vpop.f32.mrf.mxu0
  %v1834 = vadd.f32 %v1809, %v1833
  %1835 = vdwg.mxu0
  %v1836 = vadd.f32 %v1648, %v1834
  %v1837 = vxor.u32 %v1836, 2147483648
  %v1838 = vmul.f32 %v1837, 1.442695
  %v1839 = vpow.pop %v1838
  %v1840 = vadd.f32 %v1839, 1.0
  %v1841 = vrcp.pop %v1840
  %v1842 = vmul.f32 %v1840, %v1841
  %v1843 = vsub.f32 1.0, %v1842
  %v1844 = vmul.f32 %v1841, %v1843
  %v1845 = vadd.f32 %v1841, %v1844
  %vm1846 = vweird.f32 %v1840
  %vm1847 = vweird.f32 %v1841
  %vm1848 = vmor %vm1846, %vm1847
  %v1849 = vsel %vm1848, %v1841, %v1845
  %v1850 = vand.u32 2147483647, %v1840
  %vm1851 = vcmp.eq.f32.partialorder %v1850, 8.507059e+37
  %v1852 = vand.u32 %v1840, 2147483648
  %v1853 = vor.u32 1.1754944e-38, %v1852
  %v1854 = vsel %vm1851, %v1853, %v1849
  %v1855 = vmul.f32 1.0, %v1854
  %v1856 = vtanh.pop %v1836
  %v1857 = vmul.f32 %v1855, %v1634
  %1859 = vrot.lane.b32.xlu0 %v1856, 64
  %v1860 = vpop.permute.xlu0 %1859
  %v1862 = vmul.f32 %v1855, %v1860
  %1864 = vrot.lane.b32.xlu0 %v1862, 32
  %v1865 = vpop.permute.xlu0 %1864
  %v1867 = vadd.f32 %v1857, %v1865
  %v1868 = vtanh.pop %v1867
  %1870 = vrot.lane.b32.xlu0 %v1868, 64
  %v1871 = vpop.permute.xlu0 %1870
  %v1873 = vmul.f32 %v1855, %v1871
  %1875 = vrot.lane.b32.xlu0 %v1873, 32
  %v1876 = vpop.permute.xlu0 %1875
  %s1878 = scalar_lea.vmem %s2, 14
  %1879 = vst.msk [vmem:[%s1878] sm:$0x3] %vm247, %v1876
  // Predicated region
  $region10: #{attention_lstm_forward.2} parent=0 // pred_check
    _
  $region11: #{attention_lstm_forward.2} parent=0 // pred_check_branch
    %1881 = sbr.rel (0) target = $region13
  $region12: #{attention_lstm_forward.2} parent=0 // pred_region
    _
  $region13: #{attention_lstm_forward.2} parent=0 // pred_fallthru
    _
  // Predicated region
  $region14: #{attention_lstm_forward.2} parent=0 // pred_check
    _
  $region15: #{attention_lstm_forward.2} parent=0 // pred_check_branch
    %1883 = sbr.rel (0) target = $region17
  $region16: #{attention_lstm_forward.2} parent=0 // pred_region
    _
  $region17: #{attention_lstm_forward.2} parent=0 // pred_fallthru
    _

</llo_original>
